<compile_context>
chip_gen: v7x
topology: tpu7x:2x2x1
jax: 0.10.0
libtpu: 0.0.40
codegen_flags: <defaults>
</compile_context>

<pallas_src>
import jax
import jax.numpy as jnp
import numpy as np
from jax import lax
from jax.experimental import pallas as pl
from jax.experimental.pallas import tpu as pltpu


# ----------------------------------------------------------------------------
# Fully fused MIE forward: one pallas_call, single invocation (no grid).
# ----------------------------------------------------------------------------
def mie_forward(word_input, params):
    B, D, M, W = word_input.shape
    V, E = params["word_table"].shape
    H = params["wih_f"].shape[1]
    n = B * D * M            # all sequences handled in one kernel step
    G = B * D                # number of softmax groups (days)
    H2 = 2 * H
    WH = W * H
    Vp = ((V + 127) // 128) * 128   # pad vocab to a full 128-lane contraction

    # ---- tiny parameter prep (parameter-sized ops only; no activation glue) ----
    table = params["word_table"].astype(jnp.float32)
    twih_f = jnp.pad(table @ params["wih_f"], ((0, Vp - V), (0, 0)))   # [Vp, H]
    twih_b = jnp.pad(table @ params["wih_b"], ((0, Vp - V), (0, 0)))   # [Vp, H]
    z = jnp.zeros((H, H), jnp.float32)
    whh_bd = jnp.concatenate(
        [jnp.concatenate([params["whh_f"], z], axis=1),
         jnp.concatenate([z, params["whh_b"]], axis=1)], axis=0)        # [2H, 2H]

    # time-major flattened indices: row = t*n + j  (j = flattened (b,d,m));
    # idx_f holds the token at time t, idx_b the token at time W-1-t, so the
    # in-kernel [W*n, 2H] projection slab is already (x_fwd(t) | x_bwd(W-1-t))
    # paired and the recurrence loop needs no per-step reorder/concat.
    idx_flat = word_input.reshape(n, W).astype(jnp.int32)
    idx_f = jnp.transpose(idx_flat).reshape(W * n, 1)
    idx_b = jnp.transpose(idx_flat[:, ::-1]).reshape(W * n, 1)

    def kernel(idx_f_ref, idx_b_ref, twih_f_ref, twih_b_ref, bf_ref, bb_ref,
               whh_ref, wproj_ref, wattn_ref, out_ref, xp_ref):
        # 1) Embedding gather fused with the RNN input projection (one-hot
        #    matmuls against table @ wih_{f,b}); bias folded in here.
        iota = lax.broadcasted_iota(jnp.int32, (W * n, Vp), 1)
        oh_f = (iota == idx_f_ref[...]).astype(jnp.float32)              # [W*n, Vp]
        xpf = jnp.dot(oh_f, twih_f_ref[...],
                      preferred_element_type=jnp.float32) + bf_ref[...]  # [W*n, H]
        oh_b = (iota == idx_b_ref[...]).astype(jnp.float32)
        xpb = jnp.dot(oh_b, twih_b_ref[...],
                      preferred_element_type=jnp.float32) + bb_ref[...]  # [W*n, H]
        xp_ref[...] = jnp.concatenate([xpf, xpb], axis=1)                # [W*n, 2H]

        # 2) Merged fwd/bwd tanh-RNN recurrence, statically unrolled over W.
        #    Carried state h = [h_fwd | h_bwd] ([n, 2H]); block-diagonal whh so
        #    one matmul serves both directions.  bf16 operands, f32 accumulate
        #    keeps the serial matmul->tanh chain on the fast MXU path.
        whh = whh_ref[...].astype(jnp.bfloat16)                          # [2H, 2H]
        hf = jnp.tanh(xp_ref[pl.ds(0, n), :])                            # h0 == 0
        hs = [hf]
        h = hf.astype(jnp.bfloat16)
        for t in range(1, W):                                            # static unroll
            x = xp_ref[pl.ds(t * n, n), :]                               # [n, 2H] f32
            hf = jnp.tanh(x + jnp.dot(h, whh,
                                      preferred_element_type=jnp.float32))
            hs.append(hf)
            h = hf.astype(jnp.bfloat16)

        # assemble lane-dense [n, W*H] (fwd + bwd)/2 slab once, after the loop
        rnn_flat = jnp.concatenate(
            [(hs[t][:, :H] + hs[W - 1 - t][:, H:]) * 0.5 for t in range(W)],
            axis=1)                                                      # [n, W*H]

        # 3) Attention over the M messages of each day + weighted corpus embed.
        score = jnp.tanh(jnp.dot(rnn_flat, wproj_ref[...],
                                 preferred_element_type=jnp.float32))    # [n, H]
        logits = jnp.dot(score, wattn_ref[...],
                         preferred_element_type=jnp.float32)             # [n, 1]

        # per-day softmax: row j belongs to day g iff g*M <= j < (g+1)*M.
        # selT [n, G] gives each row its day; sel [G, n] reduces rows per day.
        r_i = lax.broadcasted_iota(jnp.int32, (n, G), 0)
        c_g = lax.broadcasted_iota(jnp.int32, (n, G), 1)
        selT = (r_i >= c_g * M) & (r_i < (c_g + 1) * M)                  # [n, G]
        masked = jnp.where(selT, logits, -jnp.inf)                       # [n, G]
        gmax = jnp.max(masked, axis=0, keepdims=True)                    # [1, G]
        row_max = jnp.sum(jnp.where(selT, gmax, 0.0), axis=1,
                          keepdims=True)                                 # [n, 1]
        e = jnp.exp(logits - row_max)                                    # [n, 1]

        r_g = lax.broadcasted_iota(jnp.int32, (G, n), 0)
        c_j = lax.broadcasted_iota(jnp.int32, (G, n), 1)
        sel = ((c_j >= r_g * M) & (c_j < (r_g + 1) * M)).astype(jnp.float32)
        corpus = jnp.dot(sel, e * rnn_flat,
                         preferred_element_type=jnp.float32)             # [G, W*H]
        denom = jnp.dot(sel, e, preferred_element_type=jnp.float32)      # [G, 1]
        out_ref[...] = corpus * (1.0 / denom)                            # exact divide

    out = pl.pallas_call(
        kernel,
        out_shape=jax.ShapeDtypeStruct((G, WH), jnp.float32),
        in_specs=[pl.BlockSpec(memory_space=pltpu.MemorySpace.VMEM)] * 9,
        out_specs=pl.BlockSpec(memory_space=pltpu.MemorySpace.VMEM),
        scratch_shapes=[pltpu.VMEM((W * n, H2), jnp.float32)],   # fused input proj
    )(idx_f, idx_b, twih_f, twih_b, params["b_f"], params["b_b"],
      whh_bd, params["w_proj"], params["w_attn"])

    return out.reshape(B, D, WH)


# ----------------------------------------------------------------------------
# Pure-JAX reference (for correctness check of the Pallas kernel).
# ----------------------------------------------------------------------------
def mie_reference(word_input, params):
    B, D, M, W = word_input.shape
    E = params["word_table"].shape[1]
    H = params["wih_f"].shape[1]
    we = jnp.take(params["word_table"], word_input, axis=0)
    x = we.reshape(B * D * M, W, E)

    def run_dir(x, wih, whh, b, reverse):
        xs = jnp.swapaxes(x, 0, 1)                                   # [W, N, E]
        if reverse:
            xs = xs[::-1]

        def step(h, x_t):
            h = jnp.tanh(x_t @ wih + h @ whh + b)
            return h, h

        _, hs = lax.scan(step, jnp.zeros((x.shape[0], H), jnp.float32), xs)
        if reverse:
            hs = hs[::-1]
        return jnp.swapaxes(hs, 0, 1)                                # [N, W, H]

    fwd = run_dir(x, params["wih_f"], params["whh_f"], params["b_f"], False)
    bwd = run_dir(x, params["wih_b"], params["whh_b"], params["b_b"], True)
    rnn_out = (fwd + bwd) / 2.0
    rnn_out = rnn_out.reshape(B, D, M, W * H)
    score = jnp.tanh(rnn_out @ params["w_proj"])
    logits = jnp.squeeze(score @ params["w_attn"], axis=-1)
    alpha = jax.nn.softmax(logits, axis=-1)
    return jnp.einsum("bijk,bij->bik", rnn_out, alpha)


# ----------------------------------------------------------------------------
# Deterministic parameter init + run.
# ----------------------------------------------------------------------------
def init_params(key, *, vocab_size, E, H, W):
    ks = jax.random.split(key, 9)
    scale_e = 1.0 / np.sqrt(E)
    scale_h = 1.0 / np.sqrt(H)
    scale_wh = 1.0 / np.sqrt(W * H)
    return {
        "word_table": jax.random.normal(ks[0], (vocab_size, E), jnp.float32) * 0.1,
        # forward direction RNN params (stored [in, out]); single combined bias
        # per direction (== PyTorch's b_ih + b_hh summed).
        "wih_f": jax.random.uniform(ks[1], (E, H), jnp.float32, -scale_e, scale_e),
        "whh_f": jax.random.uniform(ks[2], (H, H), jnp.float32, -scale_h, scale_h),
        "b_f": jax.random.uniform(ks[3], (1, H), jnp.float32, -scale_h, scale_h),
        # backward direction
        "wih_b": jax.random.uniform(ks[4], (E, H), jnp.float32, -scale_e, scale_e),
        "whh_b": jax.random.uniform(ks[5], (H, H), jnp.float32, -scale_h, scale_h),
        "b_b": jax.random.uniform(ks[6], (1, H), jnp.float32, -scale_h, scale_h),
        # attention_proj: Linear(W*H -> H, bias=False); attention_weight: Linear(H -> 1)
        "w_proj": jax.random.uniform(ks[7], (W * H, H), jnp.float32, -scale_wh, scale_wh),
        "w_attn": jax.random.uniform(ks[8], (H, 1), jnp.float32, -scale_h, scale_h),
    }


if __name__ == "__main__":
    # Module-consistent small shapes: batch=2, max_n_days=4, max_n_msgs=4,
    # max_n_words=8, word_embed_size=16, mel_h_size=32, vocab=50.
    B, D, M, Wn = 2, 4, 4, 8
    E, H, VOCAB = 16, 32, 50

    key = jax.random.PRNGKey(0)
    k_idx, k_par = jax.random.split(key)
    word_input = jax.random.randint(k_idx, (B, D, M, Wn), 0, VOCAB, dtype=jnp.int32)
    params = init_params(k_par, vocab_size=VOCAB, E=E, H=H, W=Wn)

    run = jax.jit(mie_forward)
    out = jax.block_until_ready(run(word_input, params))

    ref = jax.block_until_ready(mie_reference(word_input, params))
    # tolerance covers the bf16-operand recurrence matmul (f32 accumulate);
    # all other math (input projection, attention, softmax divide) is exact f32.
    np.testing.assert_allclose(np.asarray(out), np.asarray(ref),
                               rtol=2e-2, atol=2e-2)
    assert out.shape == (B, D, Wn * H)
    print("KERNEL_OK")
</pallas_src>

<mosaic_0001>
module attributes {stable_mosaic.version = 11 : i64} {
  func.func @kernel(%arg0: memref<256x1xi32, #tpu.memory_space<vmem>>, %arg1: memref<256x1xi32, #tpu.memory_space<vmem>>, %arg2: memref<128x32xf32, #tpu.memory_space<vmem>>, %arg3: memref<128x32xf32, #tpu.memory_space<vmem>>, %arg4: memref<1x32xf32, #tpu.memory_space<vmem>>, %arg5: memref<1x32xf32, #tpu.memory_space<vmem>>, %arg6: memref<64x64xf32, #tpu.memory_space<vmem>>, %arg7: memref<256x32xf32, #tpu.memory_space<vmem>>, %arg8: memref<32x1xf32, #tpu.memory_space<vmem>>, %arg9: memref<8x256xf32, #tpu.memory_space<vmem>>, %arg10: memref<256x64xf32, #tpu.memory_space<vmem>>) attributes {dimension_semantics = [], scalar_prefetch = 0 : i64, scratch_operands = 1 : i64, tpu.core_type = #tpu.core_type<tc>} {
    %0 = tpu.iota {dimensions = array<i32: 1>} : vector<256x128xi32>
    %c0 = arith.constant 0 : index
    %c0_0 = arith.constant 0 : index
    %1 = vector.load %arg0[%c0, %c0_0] : memref<256x1xi32, #tpu.memory_space<vmem>>, vector<256x1xi32>
    %2 = vector.broadcast %1 : vector<256x1xi32> to vector<256x128xi32>
    %3 = arith.cmpi eq, %0, %2 : vector<256x128xi32>
    %4 = arith.extui %3 : vector<256x128xi1> to vector<256x128xi32>
    %5 = arith.sitofp %4 : vector<256x128xi32> to vector<256x128xf32>
    %c0_1 = arith.constant 0 : index
    %c0_2 = arith.constant 0 : index
    %6 = vector.load %arg2[%c0_1, %c0_2] : memref<128x32xf32, #tpu.memory_space<vmem>>, vector<128x32xf32>
    %cst = arith.constant dense<0.000000e+00> : vector<256x32xf32>
    %7 = tpu.matmul %5, %6, %cst {dimension_numbers = #tpu.dot_dimension_numbers<[1], [0], [0], [1], [0, 0, 1, 1], [], []>} : vector<256x128xf32>, vector<128x32xf32>, vector<256x32xf32> -> vector<256x32xf32>
    %c0_3 = arith.constant 0 : index
    %c0_4 = arith.constant 0 : index
    %8 = vector.load %arg4[%c0_3, %c0_4] : memref<1x32xf32, #tpu.memory_space<vmem>>, vector<1x32xf32>
    %9 = vector.broadcast %8 : vector<1x32xf32> to vector<256x32xf32>
    %10 = arith.addf %7, %9 : vector<256x32xf32>
    %c0_5 = arith.constant 0 : index
    %c0_6 = arith.constant 0 : index
    %11 = vector.load %arg1[%c0_5, %c0_6] : memref<256x1xi32, #tpu.memory_space<vmem>>, vector<256x1xi32>
    %12 = vector.broadcast %11 : vector<256x1xi32> to vector<256x128xi32>
    %13 = arith.cmpi eq, %0, %12 : vector<256x128xi32>
    %14 = arith.extui %13 : vector<256x128xi1> to vector<256x128xi32>
    %15 = arith.sitofp %14 : vector<256x128xi32> to vector<256x128xf32>
    %c0_7 = arith.constant 0 : index
    %c0_8 = arith.constant 0 : index
    %16 = vector.load %arg3[%c0_7, %c0_8] : memref<128x32xf32, #tpu.memory_space<vmem>>, vector<128x32xf32>
    %cst_9 = arith.constant dense<0.000000e+00> : vector<256x32xf32>
    %17 = tpu.matmul %15, %16, %cst_9 {dimension_numbers = #tpu.dot_dimension_numbers<[1], [0], [0], [1], [0, 0, 1, 1], [], []>} : vector<256x128xf32>, vector<128x32xf32>, vector<256x32xf32> -> vector<256x32xf32>
    %c0_10 = arith.constant 0 : index
    %c0_11 = arith.constant 0 : index
    %18 = vector.load %arg5[%c0_10, %c0_11] : memref<1x32xf32, #tpu.memory_space<vmem>>, vector<1x32xf32>
    %19 = vector.broadcast %18 : vector<1x32xf32> to vector<256x32xf32>
    %20 = arith.addf %17, %19 : vector<256x32xf32>
    %21 = tpu.concatenate %10, %20 in 1 : vector<256x32xf32>, vector<256x32xf32> -> vector<256x64xf32>
    %c0_12 = arith.constant 0 : index
    %c0_13 = arith.constant 0 : index
    %22 = vector.load %arg10[%c0_12, %c0_13] : memref<256x64xf32, #tpu.memory_space<vmem>>, vector<256x64xf32>
    tpu.vector_store %arg10[%c0_12, %c0_13], %21 {strides = array<i32>} : memref<256x64xf32, #tpu.memory_space<vmem>>, vector<256x64xf32>,
    %c0_14 = arith.constant 0 : index
    %c0_15 = arith.constant 0 : index
    %23 = vector.load %arg6[%c0_14, %c0_15] : memref<64x64xf32, #tpu.memory_space<vmem>>, vector<64x64xf32>
    %24 = arith.truncf %23 : vector<64x64xf32> to vector<64x64xbf16>
    %c0_16 = arith.constant 0 : index
    %c0_17 = arith.constant 0 : index
    %25 = vector.load %arg10[%c0_16, %c0_17] : memref<256x64xf32, #tpu.memory_space<vmem>>, vector<32x64xf32>
    %26 = math.tanh %25 : vector<32x64xf32>
    %27 = arith.truncf %26 : vector<32x64xf32> to vector<32x64xbf16>
    %c32 = arith.constant 32 : index
    %c0_18 = arith.constant 0 : index
    %28 = vector.load %arg10[%c32, %c0_18] : memref<256x64xf32, #tpu.memory_space<vmem>>, vector<32x64xf32>
    %cst_19 = arith.constant dense<0.000000e+00> : vector<32x64xf32>
    %29 = tpu.matmul %27, %24, %cst_19 {dimension_numbers = #tpu.dot_dimension_numbers<[1], [0], [0], [1], [0, 0, 1, 1], [], []>} : vector<32x64xbf16>, vector<64x64xbf16>, vector<32x64xf32> -> vector<32x64xf32>
    %30 = arith.addf %28, %29 : vector<32x64xf32>
    %31 = math.tanh %30 : vector<32x64xf32>
    %32 = arith.truncf %31 : vector<32x64xf32> to vector<32x64xbf16>
    %c64 = arith.constant 64 : index
    %c0_20 = arith.constant 0 : index
    %33 = vector.load %arg10[%c64, %c0_20] : memref<256x64xf32, #tpu.memory_space<vmem>>, vector<32x64xf32>
    %cst_21 = arith.constant dense<0.000000e+00> : vector<32x64xf32>
    %34 = tpu.matmul %32, %24, %cst_21 {dimension_numbers = #tpu.dot_dimension_numbers<[1], [0], [0], [1], [0, 0, 1, 1], [], []>} : vector<32x64xbf16>, vector<64x64xbf16>, vector<32x64xf32> -> vector<32x64xf32>
    %35 = arith.addf %33, %34 : vector<32x64xf32>
    %36 = math.tanh %35 : vector<32x64xf32>
    %37 = arith.truncf %36 : vector<32x64xf32> to vector<32x64xbf16>
    %c96 = arith.constant 96 : index
    %c0_22 = arith.constant 0 : index
    %38 = vector.load %arg10[%c96, %c0_22] : memref<256x64xf32, #tpu.memory_space<vmem>>, vector<32x64xf32>
    %cst_23 = arith.constant dense<0.000000e+00> : vector<32x64xf32>
    %39 = tpu.matmul %37, %24, %cst_23 {dimension_numbers = #tpu.dot_dimension_numbers<[1], [0], [0], [1], [0, 0, 1, 1], [], []>} : vector<32x64xbf16>, vector<64x64xbf16>, vector<32x64xf32> -> vector<32x64xf32>
    %40 = arith.addf %38, %39 : vector<32x64xf32>
    %41 = math.tanh %40 : vector<32x64xf32>
    %42 = arith.truncf %41 : vector<32x64xf32> to vector<32x64xbf16>
    %c128 = arith.constant 128 : index
    %c0_24 = arith.constant 0 : index
    %43 = vector.load %arg10[%c128, %c0_24] : memref<256x64xf32, #tpu.memory_space<vmem>>, vector<32x64xf32>
    %cst_25 = arith.constant dense<0.000000e+00> : vector<32x64xf32>
    %44 = tpu.matmul %42, %24, %cst_25 {dimension_numbers = #tpu.dot_dimension_numbers<[1], [0], [0], [1], [0, 0, 1, 1], [], []>} : vector<32x64xbf16>, vector<64x64xbf16>, vector<32x64xf32> -> vector<32x64xf32>
    %45 = arith.addf %43, %44 : vector<32x64xf32>
    %46 = math.tanh %45 : vector<32x64xf32>
    %47 = arith.truncf %46 : vector<32x64xf32> to vector<32x64xbf16>
    %c160 = arith.constant 160 : index
    %c0_26 = arith.constant 0 : index
    %48 = vector.load %arg10[%c160, %c0_26] : memref<256x64xf32, #tpu.memory_space<vmem>>, vector<32x64xf32>
    %cst_27 = arith.constant dense<0.000000e+00> : vector<32x64xf32>
    %49 = tpu.matmul %47, %24, %cst_27 {dimension_numbers = #tpu.dot_dimension_numbers<[1], [0], [0], [1], [0, 0, 1, 1], [], []>} : vector<32x64xbf16>, vector<64x64xbf16>, vector<32x64xf32> -> vector<32x64xf32>
    %50 = arith.addf %48, %49 : vector<32x64xf32>
    %51 = math.tanh %50 : vector<32x64xf32>
    %52 = arith.truncf %51 : vector<32x64xf32> to vector<32x64xbf16>
    %c192 = arith.constant 192 : index
    %c0_28 = arith.constant 0 : index
    %53 = vector.load %arg10[%c192, %c0_28] : memref<256x64xf32, #tpu.memory_space<vmem>>, vector<32x64xf32>
    %cst_29 = arith.constant dense<0.000000e+00> : vector<32x64xf32>
    %54 = tpu.matmul %52, %24, %cst_29 {dimension_numbers = #tpu.dot_dimension_numbers<[1], [0], [0], [1], [0, 0, 1, 1], [], []>} : vector<32x64xbf16>, vector<64x64xbf16>, vector<32x64xf32> -> vector<32x64xf32>
    %55 = arith.addf %53, %54 : vector<32x64xf32>
    %56 = math.tanh %55 : vector<32x64xf32>
    %57 = arith.truncf %56 : vector<32x64xf32> to vector<32x64xbf16>
    %c224 = arith.constant 224 : index
    %c0_30 = arith.constant 0 : index
    %58 = vector.load %arg10[%c224, %c0_30] : memref<256x64xf32, #tpu.memory_space<vmem>>, vector<32x64xf32>
    %cst_31 = arith.constant dense<0.000000e+00> : vector<32x64xf32>
    %59 = tpu.matmul %57, %24, %cst_31 {dimension_numbers = #tpu.dot_dimension_numbers<[1], [0], [0], [1], [0, 0, 1, 1], [], []>} : vector<32x64xbf16>, vector<64x64xbf16>, vector<32x64xf32> -> vector<32x64xf32>
    %60 = arith.addf %58, %59 : vector<32x64xf32>
    %61 = math.tanh %60 : vector<32x64xf32>
    %62 = vector.extract_strided_slice %26 {offsets = [0, 0], sizes = [32, 32], strides = [1, 1]} : vector<32x64xf32> to vector<32x32xf32>
    %63 = vector.extract_strided_slice %61 {offsets = [0, 32], sizes = [32, 32], strides = [1, 1]} : vector<32x64xf32> to vector<32x32xf32>
    %64 = arith.addf %62, %63 : vector<32x32xf32>
    %cst_32 = arith.constant 5.000000e-01 : f32
    %65 = vector.broadcast %cst_32 : f32 to vector<32x32xf32>
    %66 = arith.mulf %64, %65 : vector<32x32xf32>
    %67 = vector.extract_strided_slice %31 {offsets = [0, 0], sizes = [32, 32], strides = [1, 1]} : vector<32x64xf32> to vector<32x32xf32>
    %68 = vector.extract_strided_slice %56 {offsets = [0, 32], sizes = [32, 32], strides = [1, 1]} : vector<32x64xf32> to vector<32x32xf32>
    %69 = arith.addf %67, %68 : vector<32x32xf32>
    %cst_33 = arith.constant 5.000000e-01 : f32
    %70 = vector.broadcast %cst_33 : f32 to vector<32x32xf32>
    %71 = arith.mulf %69, %70 : vector<32x32xf32>
    %72 = vector.extract_strided_slice %36 {offsets = [0, 0], sizes = [32, 32], strides = [1, 1]} : vector<32x64xf32> to vector<32x32xf32>
    %73 = vector.extract_strided_slice %51 {offsets = [0, 32], sizes = [32, 32], strides = [1, 1]} : vector<32x64xf32> to vector<32x32xf32>
    %74 = arith.addf %72, %73 : vector<32x32xf32>
    %cst_34 = arith.constant 5.000000e-01 : f32
    %75 = vector.broadcast %cst_34 : f32 to vector<32x32xf32>
    %76 = arith.mulf %74, %75 : vector<32x32xf32>
    %77 = vector.extract_strided_slice %41 {offsets = [0, 0], sizes = [32, 32], strides = [1, 1]} : vector<32x64xf32> to vector<32x32xf32>
    %78 = vector.extract_strided_slice %46 {offsets = [0, 32], sizes = [32, 32], strides = [1, 1]} : vector<32x64xf32> to vector<32x32xf32>
    %79 = arith.addf %77, %78 : vector<32x32xf32>
    %cst_35 = arith.constant 5.000000e-01 : f32
    %80 = vector.broadcast %cst_35 : f32 to vector<32x32xf32>
    %81 = arith.mulf %79, %80 : vector<32x32xf32>
    %82 = vector.extract_strided_slice %46 {offsets = [0, 0], sizes = [32, 32], strides = [1, 1]} : vector<32x64xf32> to vector<32x32xf32>
    %83 = vector.extract_strided_slice %41 {offsets = [0, 32], sizes = [32, 32], strides = [1, 1]} : vector<32x64xf32> to vector<32x32xf32>
    %84 = arith.addf %82, %83 : vector<32x32xf32>
    %cst_36 = arith.constant 5.000000e-01 : f32
    %85 = vector.broadcast %cst_36 : f32 to vector<32x32xf32>
    %86 = arith.mulf %84, %85 : vector<32x32xf32>
    %87 = vector.extract_strided_slice %51 {offsets = [0, 0], sizes = [32, 32], strides = [1, 1]} : vector<32x64xf32> to vector<32x32xf32>
    %88 = vector.extract_strided_slice %36 {offsets = [0, 32], sizes = [32, 32], strides = [1, 1]} : vector<32x64xf32> to vector<32x32xf32>
    %89 = arith.addf %87, %88 : vector<32x32xf32>
    %cst_37 = arith.constant 5.000000e-01 : f32
    %90 = vector.broadcast %cst_37 : f32 to vector<32x32xf32>
    %91 = arith.mulf %89, %90 : vector<32x32xf32>
    %92 = vector.extract_strided_slice %56 {offsets = [0, 0], sizes = [32, 32], strides = [1, 1]} : vector<32x64xf32> to vector<32x32xf32>
    %93 = vector.extract_strided_slice %31 {offsets = [0, 32], sizes = [32, 32], strides = [1, 1]} : vector<32x64xf32> to vector<32x32xf32>
    %94 = arith.addf %92, %93 : vector<32x32xf32>
    %cst_38 = arith.constant 5.000000e-01 : f32
    %95 = vector.broadcast %cst_38 : f32 to vector<32x32xf32>
    %96 = arith.mulf %94, %95 : vector<32x32xf32>
    %97 = vector.extract_strided_slice %61 {offsets = [0, 0], sizes = [32, 32], strides = [1, 1]} : vector<32x64xf32> to vector<32x32xf32>
    %98 = vector.extract_strided_slice %26 {offsets = [0, 32], sizes = [32, 32], strides = [1, 1]} : vector<32x64xf32> to vector<32x32xf32>
    %99 = arith.addf %97, %98 : vector<32x32xf32>
    %cst_39 = arith.constant 5.000000e-01 : f32
    %100 = vector.broadcast %cst_39 : f32 to vector<32x32xf32>
    %101 = arith.mulf %99, %100 : vector<32x32xf32>
    %102 = tpu.concatenate %66, %71, %76, %81, %86, %91, %96, %101 in 1 : vector<32x32xf32>, vector<32x32xf32>, vector<32x32xf32>, vector<32x32xf32>, vector<32x32xf32>, vector<32x32xf32>, vector<32x32xf32>, vector<32x32xf32> -> vector<32x256xf32>
    %c0_40 = arith.constant 0 : index
    %c0_41 = arith.constant 0 : index
    %103 = vector.load %arg7[%c0_40, %c0_41] : memref<256x32xf32, #tpu.memory_space<vmem>>, vector<256x32xf32>
    %cst_42 = arith.constant dense<0.000000e+00> : vector<32x32xf32>
    %104 = tpu.matmul %102, %103, %cst_42 {dimension_numbers = #tpu.dot_dimension_numbers<[1], [0], [0], [1], [0, 0, 1, 1], [], []>} : vector<32x256xf32>, vector<256x32xf32>, vector<32x32xf32> -> vector<32x32xf32>
    %105 = math.tanh %104 : vector<32x32xf32>
    %c0_43 = arith.constant 0 : index
    %c0_44 = arith.constant 0 : index
    %106 = vector.load %arg8[%c0_43, %c0_44] : memref<32x1xf32, #tpu.memory_space<vmem>>, vector<32x1xf32>
    %cst_45 = arith.constant dense<0.000000e+00> : vector<32x1xf32>
    %107 = tpu.matmul %105, %106, %cst_45 {dimension_numbers = #tpu.dot_dimension_numbers<[1], [0], [0], [1], [0, 0, 1, 1], [], []>} : vector<32x32xf32>, vector<32x1xf32>, vector<32x1xf32> -> vector<32x1xf32>
    %108 = tpu.iota {dimensions = array<i32: 0>} : vector<32x8xi32>
    %109 = tpu.iota {dimensions = array<i32: 1>} : vector<32x8xi32>
    %c4_i32 = arith.constant 4 : i32
    %110 = vector.broadcast %c4_i32 : i32 to vector<32x8xi32>
    %111 = arith.muli %109, %110 : vector<32x8xi32>
    %112 = arith.cmpi sge, %108, %111 : vector<32x8xi32>
    %c1_i32 = arith.constant 1 : i32
    %113 = vector.broadcast %c1_i32 : i32 to vector<32x8xi32>
    %114 = arith.addi %109, %113 : vector<32x8xi32>
    %c4_i32_46 = arith.constant 4 : i32
    %115 = vector.broadcast %c4_i32_46 : i32 to vector<32x8xi32>
    %116 = arith.muli %114, %115 : vector<32x8xi32>
    %117 = arith.cmpi slt, %108, %116 : vector<32x8xi32>
    %118 = arith.andi %112, %117 : vector<32x8xi1>
    %cst_47 = arith.constant 0xFF800000 : f32
    %119 = vector.shape_cast %107 : vector<32x1xf32> to vector<32x1xf32>
    %120 = vector.broadcast %119 : vector<32x1xf32> to vector<32x8xf32>
    %121 = vector.broadcast %cst_47 : f32 to vector<32x8xf32>
    %122 = arith.select %118, %120, %121 : vector<32x8xi1>, vector<32x8xf32>
    %cst_48 = arith.constant dense<0xFF800000> : vector<8xf32>
    %123 = vector.multi_reduction <maximumf>, %122, %cst_48 [0] : vector<32x8xf32> to vector<8xf32>
    %124 = vector.shape_cast %123 : vector<8xf32> to vector<1x8xf32>
    %cst_49 = arith.constant 0.000000e+00 : f32
    %125 = vector.shape_cast %124 : vector<1x8xf32> to vector<1x8xf32>
    %126 = vector.broadcast %125 : vector<1x8xf32> to vector<32x8xf32>
    %127 = vector.broadcast %cst_49 : f32 to vector<32x8xf32>
    %128 = arith.select %118, %126, %127 : vector<32x8xi1>, vector<32x8xf32>
    %cst_50 = arith.constant dense<0.000000e+00> : vector<32xf32>
    %129 = vector.multi_reduction <add>, %128, %cst_50 [1] : vector<32x8xf32> to vector<32xf32>
    %130 = vector.shape_cast %129 : vector<32xf32> to vector<32x1xf32>
    %131 = arith.subf %107, %130 : vector<32x1xf32>
    %132 = math.exp %131 : vector<32x1xf32>
    %133 = tpu.iota {dimensions = array<i32: 0>} : vector<8x32xi32>
    %134 = tpu.iota {dimensions = array<i32: 1>} : vector<8x32xi32>
    %c4_i32_51 = arith.constant 4 : i32
    %135 = vector.broadcast %c4_i32_51 : i32 to vector<8x32xi32>
    %136 = arith.muli %133, %135 : vector<8x32xi32>
    %137 = arith.cmpi sge, %134, %136 : vector<8x32xi32>
    %c1_i32_52 = arith.constant 1 : i32
    %138 = vector.broadcast %c1_i32_52 : i32 to vector<8x32xi32>
    %139 = arith.addi %133, %138 : vector<8x32xi32>
    %c4_i32_53 = arith.constant 4 : i32
    %140 = vector.broadcast %c4_i32_53 : i32 to vector<8x32xi32>
    %141 = arith.muli %139, %140 : vector<8x32xi32>
    %142 = arith.cmpi slt, %134, %141 : vector<8x32xi32>
    %143 = arith.andi %137, %142 : vector<8x32xi1>
    %144 = arith.extui %143 : vector<8x32xi1> to vector<8x32xi32>
    %145 = arith.sitofp %144 : vector<8x32xi32> to vector<8x32xf32>
    %146 = vector.broadcast %132 : vector<32x1xf32> to vector<32x256xf32>
    %147 = arith.mulf %146, %102 : vector<32x256xf32>
    %cst_54 = arith.constant dense<0.000000e+00> : vector<8x256xf32>
    %148 = tpu.matmul %145, %147, %cst_54 {dimension_numbers = #tpu.dot_dimension_numbers<[1], [0], [0], [1], [0, 0, 1, 1], [], []>} : vector<8x32xf32>, vector<32x256xf32>, vector<8x256xf32> -> vector<8x256xf32>
    %cst_55 = arith.constant dense<0.000000e+00> : vector<8x1xf32>
    %149 = tpu.matmul %145, %132, %cst_55 {dimension_numbers = #tpu.dot_dimension_numbers<[1], [0], [0], [1], [0, 0, 1, 1], [], []>} : vector<8x32xf32>, vector<32x1xf32>, vector<8x1xf32> -> vector<8x1xf32>
    %cst_56 = arith.constant 1.000000e+00 : f32
    %150 = vector.broadcast %cst_56 : f32 to vector<8x1xf32>
    %151 = arith.divf %150, %149 : vector<8x1xf32>
    %152 = vector.broadcast %151 : vector<8x1xf32> to vector<8x256xf32>
    %153 = arith.mulf %148, %152 : vector<8x256xf32>
    %c0_57 = arith.constant 0 : index
    %c0_58 = arith.constant 0 : index
    %154 = vector.load %arg9[%c0_57, %c0_58] : memref<8x256xf32, #tpu.memory_space<vmem>>, vector<8x256xf32>
    tpu.vector_store %arg9[%c0_57, %c0_58], %153 {strides = array<i32>} : memref<8x256xf32, #tpu.memory_space<vmem>>, vector<8x256xf32>,
    return
  }
}

</mosaic_0001>

<llo_original>
// kernel: mie_forward.1
$region0: #{mie_forward.1}
  #allocation0 [shape = 'u32[]', space=smem, size = 0x4, offset = 0x4, fixed_abs, tag = 'smem constant byte address 0x4 - core index']
  #allocation1 [shape = 'u32[144,128]{1,0:T(1,128)}', space=vmem, size = 0x12000, scoped, tag = 'internal scratch']
  #allocation2 [shape = 'f32[256,64]{1,0:T(8,128)}', space=vmem, size = 0x20000, scoped, tag = 'scratch operand']
  %s0 = inlined_call_operand.vmem [shape: s32[256,1], index: 0, kind: input, shape index: {}]
  %s1 = inlined_call_operand.vmem [shape: s32[256,1], index: 1, kind: input, shape index: {}]
  %s2 = inlined_call_operand.vmem [shape: f32[128,32], index: 2, kind: input, shape index: {}]
  %s3 = inlined_call_operand.vmem [shape: f32[128,32], index: 3, kind: input, shape index: {}]
  %s4 = inlined_call_operand.vmem [shape: f32[1,32], index: 4, kind: input, shape index: {}]
  %s5 = inlined_call_operand.vmem [shape: f32[1,32], index: 5, kind: input, shape index: {}]
  %s6 = inlined_call_operand.vmem [shape: f32[64,64], index: 6, kind: input, shape index: {}]
  %s7 = inlined_call_operand.vmem [shape: f32[256,32], index: 7, kind: input, shape index: {}]
  %s8 = inlined_call_operand.vmem [shape: f32[32,1], index: 8, kind: input, shape index: {}]
  %s9 = inlined_call_operand.vmem [shape: f32[8,256], index: 9, kind: output, shape index: {}]
  %s10 = sld [smem:[#allocation0]]
  $region46: #{mie_forward.1} parent=0
    _
  %s12 = ssub.s32 1, %s10
  %s13 = scalar_select 0, %s12, %s10
  // Predicated region
  $region2: #{mie_forward.1} parent=0 // pred_check
    _
  $region3: #{mie_forward.1} parent=0 // pred_check_branch
    %15 = sbr.rel (0) target = $region5
  $region4: #{mie_forward.1} parent=0 // pred_region
    _
  $region5: #{mie_forward.1} parent=0 // pred_fallthru
    _
  // Predicated region
  $region6: #{mie_forward.1} parent=0 // pred_check
    _
  $region7: #{mie_forward.1} parent=0 // pred_check_branch
    %17 = sbr.rel (0) target = $region9
  $region8: #{mie_forward.1} parent=0 // pred_region
    _
  $region9: #{mie_forward.1} parent=0 // pred_fallthru
    _
  // Predicated region
  $region10: #{mie_forward.1} parent=0 // pred_check
    _
  $region11: #{mie_forward.1} parent=0 // pred_check_branch
    %19 = sbr.rel (0) target = $region13
  $region12: #{mie_forward.1} parent=0 // pred_region
    _
  $region13: #{mie_forward.1} parent=0 // pred_fallthru
    _
  // Predicated region
  $region14: #{mie_forward.1} parent=0 // pred_check
    _
  $region15: #{mie_forward.1} parent=0 // pred_check_branch
    %21 = sbr.rel (0) target = $region17
  $region16: #{mie_forward.1} parent=0 // pred_region
    _
  $region17: #{mie_forward.1} parent=0 // pred_fallthru
    _
  // Predicated region
  $region18: #{mie_forward.1} parent=0 // pred_check
    _
  $region19: #{mie_forward.1} parent=0 // pred_check_branch
    %23 = sbr.rel (0) target = $region21
  $region20: #{mie_forward.1} parent=0 // pred_region
    _
  $region21: #{mie_forward.1} parent=0 // pred_fallthru
    _
  // Predicated region
  $region22: #{mie_forward.1} parent=0 // pred_check
    _
  $region23: #{mie_forward.1} parent=0 // pred_check_branch
    %25 = sbr.rel (0) target = $region25
  $region24: #{mie_forward.1} parent=0 // pred_region
    _
  $region25: #{mie_forward.1} parent=0 // pred_fallthru
    _
  // Predicated region
  $region26: #{mie_forward.1} parent=0 // pred_check
    _
  $region27: #{mie_forward.1} parent=0 // pred_check_branch
    %27 = sbr.rel (0) target = $region29
  $region28: #{mie_forward.1} parent=0 // pred_region
    _
  $region29: #{mie_forward.1} parent=0 // pred_fallthru
    _
  // Predicated region
  $region30: #{mie_forward.1} parent=0 // pred_check
    _
  $region31: #{mie_forward.1} parent=0 // pred_check_branch
    %29 = sbr.rel (0) target = $region33
  $region32: #{mie_forward.1} parent=0 // pred_region
    _
  $region33: #{mie_forward.1} parent=0 // pred_fallthru
    _
  // Predicated region
  $region34: #{mie_forward.1} parent=0 // pred_check
    _
  $region35: #{mie_forward.1} parent=0 // pred_check_branch
    %31 = sbr.rel (0) target = $region37
  $region36: #{mie_forward.1} parent=0 // pred_region
    _
  $region37: #{mie_forward.1} parent=0 // pred_fallthru
    _
  %v33 = vlaneseq
  %v34 = vand.u32 %v33, 127
  %v35 = vld [vmem:[%s0] sm:$0xff]
  %v36 = vld [vmem:[%s0 + $0x8] sm:$0xff]
  %v37 = vld [vmem:[%s0 + $0x10] sm:$0xff]
  %v38 = vld [vmem:[%s0 + $0x18] sm:$0xff]
  %v39 = vld [vmem:[%s0 + $0x20] sm:$0xff]
  %v40 = vld [vmem:[%s0 + $0x28] sm:$0xff]
  %v41 = vld [vmem:[%s0 + $0x30] sm:$0xff]
  %v42 = vld [vmem:[%s0 + $0x38] sm:$0xff]
  %v43 = vld [vmem:[%s0 + $0x40] sm:$0xff]
  %v44 = vld [vmem:[%s0 + $0x48] sm:$0xff]
  %v45 = vld [vmem:[%s0 + $0x50] sm:$0xff]
  %v46 = vld [vmem:[%s0 + $0x58] sm:$0xff]
  %v47 = vld [vmem:[%s0 + $0x60] sm:$0xff]
  %v48 = vld [vmem:[%s0 + $0x68] sm:$0xff]
  %v49 = vld [vmem:[%s0 + $0x70] sm:$0xff]
  %v50 = vld [vmem:[%s0 + $0x78] sm:$0xff]
  %v51 = vld [vmem:[%s0 + $0x80] sm:$0xff]
  %v52 = vld [vmem:[%s0 + $0x88] sm:$0xff]
  %v53 = vld [vmem:[%s0 + $0x90] sm:$0xff]
  %v54 = vld [vmem:[%s0 + $0x98] sm:$0xff]
  %v55 = vld [vmem:[%s0 + $0xa0] sm:$0xff]
  %v56 = vld [vmem:[%s0 + $0xa8] sm:$0xff]
  %v57 = vld [vmem:[%s0 + $0xb0] sm:$0xff]
  %v58 = vld [vmem:[%s0 + $0xb8] sm:$0xff]
  %v59 = vld [vmem:[%s0 + $0xc0] sm:$0xff]
  %v60 = vld [vmem:[%s0 + $0xc8] sm:$0xff]
  %v61 = vld [vmem:[%s0 + $0xd0] sm:$0xff]
  %v62 = vld [vmem:[%s0 + $0xd8] sm:$0xff]
  %v63 = vld [vmem:[%s0 + $0xe0] sm:$0xff]
  %v64 = vld [vmem:[%s0 + $0xe8] sm:$0xff]
  %v65 = vld [vmem:[%s0 + $0xf0] sm:$0xff]
  %v66 = vld [vmem:[%s0 + $0xf8] sm:$0xff]
  %67 = vset.pattern.permute.xlu0 0
  %68 = vperm.xlu0 %67, %v35
  %v69 = vpop.permute.xlu0 %68
  %70 = vset.pattern.permute.xlu0 0
  %71 = vperm.xlu0 %70, %v36
  %v72 = vpop.permute.xlu0 %71
  %73 = vset.pattern.permute.xlu0 0
  %74 = vperm.xlu0 %73, %v37
  %v75 = vpop.permute.xlu0 %74
  %76 = vset.pattern.permute.xlu0 0
  %77 = vperm.xlu0 %76, %v38
  %v78 = vpop.permute.xlu0 %77
  %79 = vset.pattern.permute.xlu0 0
  %80 = vperm.xlu0 %79, %v39
  %v81 = vpop.permute.xlu0 %80
  %82 = vset.pattern.permute.xlu0 0
  %83 = vperm.xlu0 %82, %v40
  %v84 = vpop.permute.xlu0 %83
  %85 = vset.pattern.permute.xlu0 0
  %86 = vperm.xlu0 %85, %v41
  %v87 = vpop.permute.xlu0 %86
  %88 = vset.pattern.permute.xlu0 0
  %89 = vperm.xlu0 %88, %v42
  %v90 = vpop.permute.xlu0 %89
  %91 = vset.pattern.permute.xlu0 0
  %92 = vperm.xlu0 %91, %v43
  %v93 = vpop.permute.xlu0 %92
  %94 = vset.pattern.permute.xlu0 0
  %95 = vperm.xlu0 %94, %v44
  %v96 = vpop.permute.xlu0 %95
  %97 = vset.pattern.permute.xlu0 0
  %98 = vperm.xlu0 %97, %v45
  %v99 = vpop.permute.xlu0 %98
  %100 = vset.pattern.permute.xlu0 0
  %101 = vperm.xlu0 %100, %v46
  %v102 = vpop.permute.xlu0 %101
  %103 = vset.pattern.permute.xlu0 0
  %104 = vperm.xlu0 %103, %v47
  %v105 = vpop.permute.xlu0 %104
  %106 = vset.pattern.permute.xlu0 0
  %107 = vperm.xlu0 %106, %v48
  %v108 = vpop.permute.xlu0 %107
  %109 = vset.pattern.permute.xlu0 0
  %110 = vperm.xlu0 %109, %v49
  %v111 = vpop.permute.xlu0 %110
  %112 = vset.pattern.permute.xlu0 0
  %113 = vperm.xlu0 %112, %v50
  %v114 = vpop.permute.xlu0 %113
  %115 = vset.pattern.permute.xlu0 0
  %116 = vperm.xlu0 %115, %v51
  %v117 = vpop.permute.xlu0 %116
  %118 = vset.pattern.permute.xlu0 0
  %119 = vperm.xlu0 %118, %v52
  %v120 = vpop.permute.xlu0 %119
  %121 = vset.pattern.permute.xlu0 0
  %122 = vperm.xlu0 %121, %v53
  %v123 = vpop.permute.xlu0 %122
  %124 = vset.pattern.permute.xlu0 0
  %125 = vperm.xlu0 %124, %v54
  %v126 = vpop.permute.xlu0 %125
  %127 = vset.pattern.permute.xlu0 0
  %128 = vperm.xlu0 %127, %v55
  %v129 = vpop.permute.xlu0 %128
  %130 = vset.pattern.permute.xlu0 0
  %131 = vperm.xlu0 %130, %v56
  %v132 = vpop.permute.xlu0 %131
  %133 = vset.pattern.permute.xlu0 0
  %134 = vperm.xlu0 %133, %v57
  %v135 = vpop.permute.xlu0 %134
  %136 = vset.pattern.permute.xlu0 0
  %137 = vperm.xlu0 %136, %v58
  %v138 = vpop.permute.xlu0 %137
  %139 = vset.pattern.permute.xlu0 0
  %140 = vperm.xlu0 %139, %v59
  %v141 = vpop.permute.xlu0 %140
  %142 = vset.pattern.permute.xlu0 0
  %143 = vperm.xlu0 %142, %v60
  %v144 = vpop.permute.xlu0 %143
  %145 = vset.pattern.permute.xlu0 0
  %146 = vperm.xlu0 %145, %v61
  %v147 = vpop.permute.xlu0 %146
  %148 = vset.pattern.permute.xlu0 0
  %149 = vperm.xlu0 %148, %v62
  %v150 = vpop.permute.xlu0 %149
  %151 = vset.pattern.permute.xlu0 0
  %152 = vperm.xlu0 %151, %v63
  %v153 = vpop.permute.xlu0 %152
  %154 = vset.pattern.permute.xlu0 0
  %155 = vperm.xlu0 %154, %v64
  %v156 = vpop.permute.xlu0 %155
  %157 = vset.pattern.permute.xlu0 0
  %158 = vperm.xlu0 %157, %v65
  %v159 = vpop.permute.xlu0 %158
  %160 = vset.pattern.permute.xlu0 0
  %161 = vperm.xlu0 %160, %v66
  %v162 = vpop.permute.xlu0 %161
  %vm163 = vcmp.eq.s32.totalorder %v34, %v69
  %vm164 = vcmp.eq.s32.totalorder %v34, %v72
  %vm165 = vcmp.eq.s32.totalorder %v34, %v75
  %vm166 = vcmp.eq.s32.totalorder %v34, %v78
  %vm167 = vcmp.eq.s32.totalorder %v34, %v81
  %vm168 = vcmp.eq.s32.totalorder %v34, %v84
  %vm169 = vcmp.eq.s32.totalorder %v34, %v87
  %vm170 = vcmp.eq.s32.totalorder %v34, %v90
  %vm171 = vcmp.eq.s32.totalorder %v34, %v93
  %vm172 = vcmp.eq.s32.totalorder %v34, %v96
  %vm173 = vcmp.eq.s32.totalorder %v34, %v99
  %vm174 = vcmp.eq.s32.totalorder %v34, %v102
  %vm175 = vcmp.eq.s32.totalorder %v34, %v105
  %vm176 = vcmp.eq.s32.totalorder %v34, %v108
  %vm177 = vcmp.eq.s32.totalorder %v34, %v111
  %vm178 = vcmp.eq.s32.totalorder %v34, %v114
  %vm179 = vcmp.eq.s32.totalorder %v34, %v117
  %vm180 = vcmp.eq.s32.totalorder %v34, %v120
  %vm181 = vcmp.eq.s32.totalorder %v34, %v123
  %vm182 = vcmp.eq.s32.totalorder %v34, %v126
  %vm183 = vcmp.eq.s32.totalorder %v34, %v129
  %vm184 = vcmp.eq.s32.totalorder %v34, %v132
  %vm185 = vcmp.eq.s32.totalorder %v34, %v135
  %vm186 = vcmp.eq.s32.totalorder %v34, %v138
  %vm187 = vcmp.eq.s32.totalorder %v34, %v141
  %vm188 = vcmp.eq.s32.totalorder %v34, %v144
  %vm189 = vcmp.eq.s32.totalorder %v34, %v147
  %vm190 = vcmp.eq.s32.totalorder %v34, %v150
  %vm191 = vcmp.eq.s32.totalorder %v34, %v153
  %vm192 = vcmp.eq.s32.totalorder %v34, %v156
  %vm193 = vcmp.eq.s32.totalorder %v34, %v159
  %vm194 = vcmp.eq.s32.totalorder %v34, %v162
  %v195 = vsel %vm163, 1, 0
  %v196 = vsel %vm164, 1, 0
  %v197 = vsel %vm165, 1, 0
  %v198 = vsel %vm166, 1, 0
  %v199 = vsel %vm167, 1, 0
  %v200 = vsel %vm168, 1, 0
  %v201 = vsel %vm169, 1, 0
  %v202 = vsel %vm170, 1, 0
  %v203 = vsel %vm171, 1, 0
  %v204 = vsel %vm172, 1, 0
  %v205 = vsel %vm173, 1, 0
  %v206 = vsel %vm174, 1, 0
  %v207 = vsel %vm175, 1, 0
  %v208 = vsel %vm176, 1, 0
  %v209 = vsel %vm177, 1, 0
  %v210 = vsel %vm178, 1, 0
  %v211 = vsel %vm179, 1, 0
  %v212 = vsel %vm180, 1, 0
  %v213 = vsel %vm181, 1, 0
  %v214 = vsel %vm182, 1, 0
  %v215 = vsel %vm183, 1, 0
  %v216 = vsel %vm184, 1, 0
  %v217 = vsel %vm185, 1, 0
  %v218 = vsel %vm186, 1, 0
  %v219 = vsel %vm187, 1, 0
  %v220 = vsel %vm188, 1, 0
  %v221 = vsel %vm189, 1, 0
  %v222 = vsel %vm190, 1, 0
  %v223 = vsel %vm191, 1, 0
  %v224 = vsel %vm192, 1, 0
  %v225 = vsel %vm193, 1, 0
  %v226 = vsel %vm194, 1, 0
  %v227 = vcvt.s32.f32 %v195
  %v228 = vcvt.s32.f32 %v196
  %v229 = vcvt.s32.f32 %v197
  %v230 = vcvt.s32.f32 %v198
  %v231 = vcvt.s32.f32 %v199
  %v232 = vcvt.s32.f32 %v200
  %v233 = vcvt.s32.f32 %v201
  %v234 = vcvt.s32.f32 %v202
  %v235 = vcvt.s32.f32 %v203
  %v236 = vcvt.s32.f32 %v204
  %v237 = vcvt.s32.f32 %v205
  %v238 = vcvt.s32.f32 %v206
  %v239 = vcvt.s32.f32 %v207
  %v240 = vcvt.s32.f32 %v208
  %v241 = vcvt.s32.f32 %v209
  %v242 = vcvt.s32.f32 %v210
  %v243 = vcvt.s32.f32 %v211
  %v244 = vcvt.s32.f32 %v212
  %v245 = vcvt.s32.f32 %v213
  %v246 = vcvt.s32.f32 %v214
  %v247 = vcvt.s32.f32 %v215
  %v248 = vcvt.s32.f32 %v216
  %v249 = vcvt.s32.f32 %v217
  %v250 = vcvt.s32.f32 %v218
  %v251 = vcvt.s32.f32 %v219
  %v252 = vcvt.s32.f32 %v220
  %v253 = vcvt.s32.f32 %v221
  %v254 = vcvt.s32.f32 %v222
  %v255 = vcvt.s32.f32 %v223
  %v256 = vcvt.s32.f32 %v224
  %v257 = vcvt.s32.f32 %v225
  %v258 = vcvt.s32.f32 %v226
  %v259 = vld [vmem:[%s2] sm:$0xff]
  %v260 = vld [vmem:[%s2 + $0x8] sm:$0xff]
  %v261 = vld [vmem:[%s2 + $0x10] sm:$0xff]
  %v262 = vld [vmem:[%s2 + $0x18] sm:$0xff]
  %v263 = vld [vmem:[%s2 + $0x20] sm:$0xff]
  %v264 = vld [vmem:[%s2 + $0x28] sm:$0xff]
  %v265 = vld [vmem:[%s2 + $0x30] sm:$0xff]
  %v266 = vld [vmem:[%s2 + $0x38] sm:$0xff]
  %v267 = vld [vmem:[%s2 + $0x40] sm:$0xff]
  %v268 = vld [vmem:[%s2 + $0x48] sm:$0xff]
  %v269 = vld [vmem:[%s2 + $0x50] sm:$0xff]
  %v270 = vld [vmem:[%s2 + $0x58] sm:$0xff]
  %v271 = vld [vmem:[%s2 + $0x60] sm:$0xff]
  %v272 = vld [vmem:[%s2 + $0x68] sm:$0xff]
  %v273 = vld [vmem:[%s2 + $0x70] sm:$0xff]
  %v274 = vld [vmem:[%s2 + $0x78] sm:$0xff]
  %v275 = vld [vmem:[%s4] sm:$0x1]
  %v277 = vlaneseq
  %v278 = vshrl.u32 %v277, 7
  %v279 = vsub.s32 0, %v278
  %v280 = vrot.slane %v275, %v279
  %282 = vmatprep.subr.mxu0 0.0
  %283 = vmatpush1.msra.mxu0 %v259
  %284 = vmatprep.subr.mxu0 0.0
  %285 = vmatpush1.msra.mxu0 %v260
  %286 = vmatprep.subr.mxu0 0.0
  %287 = vmatpush1.msra.mxu0 %v261
  %288 = vmatprep.subr.mxu0 0.0
  %289 = vmatpush1.msra.mxu0 %v262
  %290 = vmatprep.subr.mxu0 0.0
  %291 = vmatpush1.msra.mxu0 %v263
  %292 = vmatprep.subr.mxu0 0.0
  %293 = vmatpush1.msra.mxu0 %v264
  %294 = vmatprep.subr.mxu0 0.0
  %295 = vmatpush1.msra.mxu0 %v265
  %296 = vmatprep.subr.mxu0 0.0
  %297 = vmatpush1.msra.mxu0 %v266
  %298 = vmatprep.subr.mxu0 0.0
  %299 = vmatpush1.msra.mxu0 %v267
  %300 = vmatprep.subr.mxu0 0.0
  %301 = vmatpush1.msra.mxu0 %v268
  %302 = vmatprep.subr.mxu0 0.0
  %303 = vmatpush1.msra.mxu0 %v269
  %304 = vmatprep.subr.mxu0 0.0
  %305 = vmatpush1.msra.mxu0 %v270
  %306 = vmatprep.subr.mxu0 0.0
  %307 = vmatpush1.msra.mxu0 %v271
  %308 = vmatprep.subr.mxu0 0.0
  %309 = vmatpush1.msra.mxu0 %v272
  %310 = vmatprep.subr.mxu0 0.0
  %311 = vmatpush1.msra.mxu0 %v273
  %312 = vmatprep.subr.mxu0 0.0
  %313 = vmatpush1.msra.mxu0 %v274
  %314 = vmatprep.subr.mxu0 0.0
  %315 = vmatpush1.msra.mxu0 0.0
  %316 = vmatprep.subr.mxu0 0.0
  %317 = vmatpush1.msra.mxu0 0.0
  %318 = vmatprep.subr.mxu0 0.0
  %319 = vmatpush1.msra.mxu0 0.0
  %320 = vmatprep.subr.mxu0 0.0
  %321 = vmatpush1.msra.mxu0 0.0
  %322 = vmatprep.subr.mxu0 0.0
  %323 = vmatpush1.msra.mxu0 0.0
  %324 = vmatprep.subr.mxu0 0.0
  %325 = vmatpush1.msra.mxu0 0.0
  %326 = vmatprep.subr.mxu0 0.0
  %327 = vmatpush1.msra.mxu0 0.0
  %328 = vmatprep.subr.mxu0 0.0
  %329 = vmatpush1.msra.mxu0 0.0
  %330 = vmatprep.subr.mxu0 0.0
  %331 = vmatpush1.msra.mxu0 0.0
  %332 = vmatprep.subr.mxu0 0.0
  %333 = vmatpush1.msra.mxu0 0.0
  %334 = vmatprep.subr.mxu0 0.0
  %335 = vmatpush1.msra.mxu0 0.0
  %336 = vmatprep.subr.mxu0 0.0
  %337 = vmatpush1.msra.mxu0 0.0
  %338 = vmatprep.subr.mxu0 0.0
  %339 = vmatpush1.msra.mxu0 0.0
  %340 = vmatprep.subr.mxu0 0.0
  %341 = vmatpush1.msra.mxu0 0.0
  %342 = vmatprep.subr.mxu0 0.0
  %343 = vmatpush1.msra.mxu0 0.0
  %344 = vmatprep.subr.mxu0 0.0
  %345 = vmatpush1.msra.mxu0 0.0
  %346 = vmatprep.mubr.f32.mxu0 0.0
  %347 = vmatmul.mubr.f32.gmra.mrb[0].mxu0 %v227
  %v348 = vpop.f32.mrb[0].mxu0
  %v349 = vadd.f32 %v280, %v348
  %v350 = vpop.f32.mrb[0].mxu0
  %351 = vmatprep.mubr.f32.mxu0 0.0
  %352 = vmatmul.mubr.f32.gmra.mrb[0].mxu0 %v228
  %v353 = vpop.f32.mrb[0].mxu0
  %v354 = vadd.f32 %v280, %v353
  %v355 = vpop.f32.mrb[0].mxu0
  %356 = vmatprep.mubr.f32.mxu0 0.0
  %357 = vmatmul.mubr.f32.gmra.mrb[0].mxu0 %v229
  %v358 = vpop.f32.mrb[0].mxu0
  %v359 = vadd.f32 %v280, %v358
  %v360 = vpop.f32.mrb[0].mxu0
  %361 = vmatprep.mubr.f32.mxu0 0.0
  %362 = vmatmul.mubr.f32.gmra.mrb[0].mxu0 %v230
  %v363 = vpop.f32.mrb[0].mxu0
  %v364 = vadd.f32 %v280, %v363
  %v365 = vpop.f32.mrb[0].mxu0
  %366 = vmatprep.mubr.f32.mxu0 0.0
  %367 = vmatmul.mubr.f32.gmra.mrb[0].mxu0 %v231
  %v368 = vpop.f32.mrb[0].mxu0
  %v369 = vadd.f32 %v280, %v368
  %v370 = vpop.f32.mrb[0].mxu0
  %371 = vmatprep.mubr.f32.mxu0 0.0
  %372 = vmatmul.mubr.f32.gmra.mrb[0].mxu0 %v232
  %v373 = vpop.f32.mrb[0].mxu0
  %v374 = vadd.f32 %v280, %v373
  %v375 = vpop.f32.mrb[0].mxu0
  %376 = vmatprep.mubr.f32.mxu0 0.0
  %377 = vmatmul.mubr.f32.gmra.mrb[0].mxu0 %v233
  %v378 = vpop.f32.mrb[0].mxu0
  %v379 = vadd.f32 %v280, %v378
  %v380 = vpop.f32.mrb[0].mxu0
  %381 = vmatprep.mubr.f32.mxu0 0.0
  %382 = vmatmul.mubr.f32.gmra.mrb[0].mxu0 %v234
  %v383 = vpop.f32.mrb[0].mxu0
  %v384 = vadd.f32 %v280, %v383
  %v385 = vpop.f32.mrb[0].mxu0
  %386 = vmatprep.mubr.f32.mxu0 0.0
  %387 = vmatmul.mubr.f32.gmra.mrb[0].mxu0 %v235
  %v388 = vpop.f32.mrb[0].mxu0
  %v389 = vadd.f32 %v280, %v388
  %v390 = vpop.f32.mrb[0].mxu0
  %391 = vmatprep.mubr.f32.mxu0 0.0
  %392 = vmatmul.mubr.f32.gmra.mrb[0].mxu0 %v236
  %v393 = vpop.f32.mrb[0].mxu0
  %v394 = vadd.f32 %v280, %v393
  %v395 = vpop.f32.mrb[0].mxu0
  %396 = vmatprep.mubr.f32.mxu0 0.0
  %397 = vmatmul.mubr.f32.gmra.mrb[0].mxu0 %v237
  %v398 = vpop.f32.mrb[0].mxu0
  %v399 = vadd.f32 %v280, %v398
  %v400 = vpop.f32.mrb[0].mxu0
  %401 = vmatprep.mubr.f32.mxu0 0.0
  %402 = vmatmul.mubr.f32.gmra.mrb[0].mxu0 %v238
  %v403 = vpop.f32.mrb[0].mxu0
  %v404 = vadd.f32 %v280, %v403
  %v405 = vpop.f32.mrb[0].mxu0
  %406 = vmatprep.mubr.f32.mxu0 0.0
  %407 = vmatmul.mubr.f32.gmra.mrb[0].mxu0 %v239
  %v408 = vpop.f32.mrb[0].mxu0
  %v409 = vadd.f32 %v280, %v408
  %v410 = vpop.f32.mrb[0].mxu0
  %411 = vmatprep.mubr.f32.mxu0 0.0
  %412 = vmatmul.mubr.f32.gmra.mrb[0].mxu0 %v240
  %v413 = vpop.f32.mrb[0].mxu0
  %v414 = vadd.f32 %v280, %v413
  %v415 = vpop.f32.mrb[0].mxu0
  %416 = vmatprep.mubr.f32.mxu0 0.0
  %417 = vmatmul.mubr.f32.gmra.mrb[0].mxu0 %v241
  %v418 = vpop.f32.mrb[0].mxu0
  %v419 = vadd.f32 %v280, %v418
  %v420 = vpop.f32.mrb[0].mxu0
  %421 = vmatprep.mubr.f32.mxu0 0.0
  %422 = vmatmul.mubr.f32.gmra.mrb[0].mxu0 %v242
  %v423 = vpop.f32.mrb[0].mxu0
  %v424 = vadd.f32 %v280, %v423
  %v425 = vpop.f32.mrb[0].mxu0
  %426 = vmatprep.mubr.f32.mxu0 0.0
  %427 = vmatmul.mubr.f32.gmra.mrb[0].mxu0 %v243
  %v428 = vpop.f32.mrb[0].mxu0
  %v429 = vadd.f32 %v280, %v428
  %v430 = vpop.f32.mrb[0].mxu0
  %431 = vmatprep.mubr.f32.mxu0 0.0
  %432 = vmatmul.mubr.f32.gmra.mrb[0].mxu0 %v244
  %v433 = vpop.f32.mrb[0].mxu0
  %v434 = vadd.f32 %v280, %v433
  %v435 = vpop.f32.mrb[0].mxu0
  %436 = vmatprep.mubr.f32.mxu0 0.0
  %437 = vmatmul.mubr.f32.gmra.mrb[0].mxu0 %v245
  %v438 = vpop.f32.mrb[0].mxu0
  %v439 = vadd.f32 %v280, %v438
  %v440 = vpop.f32.mrb[0].mxu0
  %441 = vmatprep.mubr.f32.mxu0 0.0
  %442 = vmatmul.mubr.f32.gmra.mrb[0].mxu0 %v246
  %v443 = vpop.f32.mrb[0].mxu0
  %v444 = vadd.f32 %v280, %v443
  %v445 = vpop.f32.mrb[0].mxu0
  %446 = vmatprep.mubr.f32.mxu0 0.0
  %447 = vmatmul.mubr.f32.gmra.mrb[0].mxu0 %v247
  %v448 = vpop.f32.mrb[0].mxu0
  %v449 = vadd.f32 %v280, %v448
  %v450 = vpop.f32.mrb[0].mxu0
  %451 = vmatprep.mubr.f32.mxu0 0.0
  %452 = vmatmul.mubr.f32.gmra.mrb[0].mxu0 %v248
  %v453 = vpop.f32.mrb[0].mxu0
  %v454 = vadd.f32 %v280, %v453
  %v455 = vpop.f32.mrb[0].mxu0
  %456 = vmatprep.mubr.f32.mxu0 0.0
  %457 = vmatmul.mubr.f32.gmra.mrb[0].mxu0 %v249
  %v458 = vpop.f32.mrb[0].mxu0
  %v459 = vadd.f32 %v280, %v458
  %v460 = vpop.f32.mrb[0].mxu0
  %461 = vmatprep.mubr.f32.mxu0 0.0
  %462 = vmatmul.mubr.f32.gmra.mrb[0].mxu0 %v250
  %v463 = vpop.f32.mrb[0].mxu0
  %v464 = vadd.f32 %v280, %v463
  %v465 = vpop.f32.mrb[0].mxu0
  %466 = vmatprep.mubr.f32.mxu0 0.0
  %467 = vmatmul.mubr.f32.gmra.mrb[0].mxu0 %v251
  %v468 = vpop.f32.mrb[0].mxu0
  %v469 = vadd.f32 %v280, %v468
  %v470 = vpop.f32.mrb[0].mxu0
  %471 = vmatprep.mubr.f32.mxu0 0.0
  %472 = vmatmul.mubr.f32.gmra.mrb[0].mxu0 %v252
  %v473 = vpop.f32.mrb[0].mxu0
  %v474 = vadd.f32 %v280, %v473
  %v475 = vpop.f32.mrb[0].mxu0
  %476 = vmatprep.mubr.f32.mxu0 0.0
  %477 = vmatmul.mubr.f32.gmra.mrb[0].mxu0 %v253
  %v478 = vpop.f32.mrb[0].mxu0
  %v479 = vadd.f32 %v280, %v478
  %v480 = vpop.f32.mrb[0].mxu0
  %481 = vmatprep.mubr.f32.mxu0 0.0
  %482 = vmatmul.mubr.f32.gmra.mrb[0].mxu0 %v254
  %v483 = vpop.f32.mrb[0].mxu0
  %v484 = vadd.f32 %v280, %v483
  %v485 = vpop.f32.mrb[0].mxu0
  %486 = vmatprep.mubr.f32.mxu0 0.0
  %487 = vmatmul.mubr.f32.gmra.mrb[0].mxu0 %v255
  %v488 = vpop.f32.mrb[0].mxu0
  %v489 = vadd.f32 %v280, %v488
  %v490 = vpop.f32.mrb[0].mxu0
  %491 = vmatprep.mubr.f32.mxu0 0.0
  %492 = vmatmul.mubr.f32.gmra.mrb[0].mxu0 %v256
  %v493 = vpop.f32.mrb[0].mxu0
  %v494 = vadd.f32 %v280, %v493
  %v495 = vpop.f32.mrb[0].mxu0
  %496 = vmatprep.mubr.f32.mxu0 0.0
  %497 = vmatmul.mubr.f32.gmra.mrb[0].mxu0 %v257
  %v498 = vpop.f32.mrb[0].mxu0
  %v499 = vadd.f32 %v280, %v498
  %v500 = vpop.f32.mrb[0].mxu0
  %501 = vmatprep.mubr.f32.mxu0 0.0
  %502 = vmatmul.mubr.f32.gmra.mrb[0].mxu0 %v258
  %v503 = vpop.f32.mrb[0].mxu0
  %v504 = vadd.f32 %v280, %v503
  %v505 = vpop.f32.mrb[0].mxu0
  %506 = vdwg.mxu0
  %v507 = vld [vmem:[%s1] sm:$0xff]
  %v508 = vld [vmem:[%s1 + $0x8] sm:$0xff]
  %v509 = vld [vmem:[%s1 + $0x10] sm:$0xff]
  %v510 = vld [vmem:[%s1 + $0x18] sm:$0xff]
  %v511 = vld [vmem:[%s1 + $0x20] sm:$0xff]
  %v512 = vld [vmem:[%s1 + $0x28] sm:$0xff]
  %v513 = vld [vmem:[%s1 + $0x30] sm:$0xff]
  %v514 = vld [vmem:[%s1 + $0x38] sm:$0xff]
  %v515 = vld [vmem:[%s1 + $0x40] sm:$0xff]
  %v516 = vld [vmem:[%s1 + $0x48] sm:$0xff]
  %v517 = vld [vmem:[%s1 + $0x50] sm:$0xff]
  %v518 = vld [vmem:[%s1 + $0x58] sm:$0xff]
  %v519 = vld [vmem:[%s1 + $0x60] sm:$0xff]
  %v520 = vld [vmem:[%s1 + $0x68] sm:$0xff]
  %v521 = vld [vmem:[%s1 + $0x70] sm:$0xff]
  %v522 = vld [vmem:[%s1 + $0x78] sm:$0xff]
  %v523 = vld [vmem:[%s1 + $0x80] sm:$0xff]
  %v524 = vld [vmem:[%s1 + $0x88] sm:$0xff]
  %v525 = vld [vmem:[%s1 + $0x90] sm:$0xff]
  %v526 = vld [vmem:[%s1 + $0x98] sm:$0xff]
  %v527 = vld [vmem:[%s1 + $0xa0] sm:$0xff]
  %v528 = vld [vmem:[%s1 + $0xa8] sm:$0xff]
  %v529 = vld [vmem:[%s1 + $0xb0] sm:$0xff]
  %v530 = vld [vmem:[%s1 + $0xb8] sm:$0xff]
  %v531 = vld [vmem:[%s1 + $0xc0] sm:$0xff]
  %v532 = vld [vmem:[%s1 + $0xc8] sm:$0xff]
  %v533 = vld [vmem:[%s1 + $0xd0] sm:$0xff]
  %v534 = vld [vmem:[%s1 + $0xd8] sm:$0xff]
  %v535 = vld [vmem:[%s1 + $0xe0] sm:$0xff]
  %v536 = vld [vmem:[%s1 + $0xe8] sm:$0xff]
  %v537 = vld [vmem:[%s1 + $0xf0] sm:$0xff]
  %v538 = vld [vmem:[%s1 + $0xf8] sm:$0xff]
  %539 = vset.pattern.permute.xlu0 0
  %540 = vperm.xlu0 %539, %v507
  %v541 = vpop.permute.xlu0 %540
  %542 = vset.pattern.permute.xlu0 0
  %543 = vperm.xlu0 %542, %v508
  %v544 = vpop.permute.xlu0 %543
  %545 = vset.pattern.permute.xlu0 0
  %546 = vperm.xlu0 %545, %v509
  %v547 = vpop.permute.xlu0 %546
  %548 = vset.pattern.permute.xlu0 0
  %549 = vperm.xlu0 %548, %v510
  %v550 = vpop.permute.xlu0 %549
  %551 = vset.pattern.permute.xlu0 0
  %552 = vperm.xlu0 %551, %v511
  %v553 = vpop.permute.xlu0 %552
  %554 = vset.pattern.permute.xlu0 0
  %555 = vperm.xlu0 %554, %v512
  %v556 = vpop.permute.xlu0 %555
  %557 = vset.pattern.permute.xlu0 0
  %558 = vperm.xlu0 %557, %v513
  %v559 = vpop.permute.xlu0 %558
  %560 = vset.pattern.permute.xlu0 0
  %561 = vperm.xlu0 %560, %v514
  %v562 = vpop.permute.xlu0 %561
  %563 = vset.pattern.permute.xlu0 0
  %564 = vperm.xlu0 %563, %v515
  %v565 = vpop.permute.xlu0 %564
  %566 = vset.pattern.permute.xlu0 0
  %567 = vperm.xlu0 %566, %v516
  %v568 = vpop.permute.xlu0 %567
  %569 = vset.pattern.permute.xlu0 0
  %570 = vperm.xlu0 %569, %v517
  %v571 = vpop.permute.xlu0 %570
  %572 = vset.pattern.permute.xlu0 0
  %573 = vperm.xlu0 %572, %v518
  %v574 = vpop.permute.xlu0 %573
  %575 = vset.pattern.permute.xlu0 0
  %576 = vperm.xlu0 %575, %v519
  %v577 = vpop.permute.xlu0 %576
  %578 = vset.pattern.permute.xlu0 0
  %579 = vperm.xlu0 %578, %v520
  %v580 = vpop.permute.xlu0 %579
  %581 = vset.pattern.permute.xlu0 0
  %582 = vperm.xlu0 %581, %v521
  %v583 = vpop.permute.xlu0 %582
  %584 = vset.pattern.permute.xlu0 0
  %585 = vperm.xlu0 %584, %v522
  %v586 = vpop.permute.xlu0 %585
  %587 = vset.pattern.permute.xlu0 0
  %588 = vperm.xlu0 %587, %v523
  %v589 = vpop.permute.xlu0 %588
  %590 = vset.pattern.permute.xlu0 0
  %591 = vperm.xlu0 %590, %v524
  %v592 = vpop.permute.xlu0 %591
  %593 = vset.pattern.permute.xlu0 0
  %594 = vperm.xlu0 %593, %v525
  %v595 = vpop.permute.xlu0 %594
  %596 = vset.pattern.permute.xlu0 0
  %597 = vperm.xlu0 %596, %v526
  %v598 = vpop.permute.xlu0 %597
  %599 = vset.pattern.permute.xlu0 0
  %600 = vperm.xlu0 %599, %v527
  %v601 = vpop.permute.xlu0 %600
  %602 = vset.pattern.permute.xlu0 0
  %603 = vperm.xlu0 %602, %v528
  %v604 = vpop.permute.xlu0 %603
  %605 = vset.pattern.permute.xlu0 0
  %606 = vperm.xlu0 %605, %v529
  %v607 = vpop.permute.xlu0 %606
  %608 = vset.pattern.permute.xlu0 0
  %609 = vperm.xlu0 %608, %v530
  %v610 = vpop.permute.xlu0 %609
  %611 = vset.pattern.permute.xlu0 0
  %612 = vperm.xlu0 %611, %v531
  %v613 = vpop.permute.xlu0 %612
  %614 = vset.pattern.permute.xlu0 0
  %615 = vperm.xlu0 %614, %v532
  %v616 = vpop.permute.xlu0 %615
  %617 = vset.pattern.permute.xlu0 0
  %618 = vperm.xlu0 %617, %v533
  %v619 = vpop.permute.xlu0 %618
  %620 = vset.pattern.permute.xlu0 0
  %621 = vperm.xlu0 %620, %v534
  %v622 = vpop.permute.xlu0 %621
  %623 = vset.pattern.permute.xlu0 0
  %624 = vperm.xlu0 %623, %v535
  %v625 = vpop.permute.xlu0 %624
  %626 = vset.pattern.permute.xlu0 0
  %627 = vperm.xlu0 %626, %v536
  %v628 = vpop.permute.xlu0 %627
  %629 = vset.pattern.permute.xlu0 0
  %630 = vperm.xlu0 %629, %v537
  %v631 = vpop.permute.xlu0 %630
  %632 = vset.pattern.permute.xlu0 0
  %633 = vperm.xlu0 %632, %v538
  %v634 = vpop.permute.xlu0 %633
  %vm635 = vcmp.eq.s32.totalorder %v34, %v541
  %vm636 = vcmp.eq.s32.totalorder %v34, %v544
  %vm637 = vcmp.eq.s32.totalorder %v34, %v547
  %vm638 = vcmp.eq.s32.totalorder %v34, %v550
  %vm639 = vcmp.eq.s32.totalorder %v34, %v553
  %vm640 = vcmp.eq.s32.totalorder %v34, %v556
  %vm641 = vcmp.eq.s32.totalorder %v34, %v559
  %vm642 = vcmp.eq.s32.totalorder %v34, %v562
  %vm643 = vcmp.eq.s32.totalorder %v34, %v565
  %vm644 = vcmp.eq.s32.totalorder %v34, %v568
  %vm645 = vcmp.eq.s32.totalorder %v34, %v571
  %vm646 = vcmp.eq.s32.totalorder %v34, %v574
  %vm647 = vcmp.eq.s32.totalorder %v34, %v577
  %vm648 = vcmp.eq.s32.totalorder %v34, %v580
  %vm649 = vcmp.eq.s32.totalorder %v34, %v583
  %vm650 = vcmp.eq.s32.totalorder %v34, %v586
  %vm651 = vcmp.eq.s32.totalorder %v34, %v589
  %vm652 = vcmp.eq.s32.totalorder %v34, %v592
  %vm653 = vcmp.eq.s32.totalorder %v34, %v595
  %vm654 = vcmp.eq.s32.totalorder %v34, %v598
  %vm655 = vcmp.eq.s32.totalorder %v34, %v601
  %vm656 = vcmp.eq.s32.totalorder %v34, %v604
  %vm657 = vcmp.eq.s32.totalorder %v34, %v607
  %vm658 = vcmp.eq.s32.totalorder %v34, %v610
  %vm659 = vcmp.eq.s32.totalorder %v34, %v613
  %vm660 = vcmp.eq.s32.totalorder %v34, %v616
  %vm661 = vcmp.eq.s32.totalorder %v34, %v619
  %vm662 = vcmp.eq.s32.totalorder %v34, %v622
  %vm663 = vcmp.eq.s32.totalorder %v34, %v625
  %vm664 = vcmp.eq.s32.totalorder %v34, %v628
  %vm665 = vcmp.eq.s32.totalorder %v34, %v631
  %vm666 = vcmp.eq.s32.totalorder %v34, %v634
  %v667 = vsel %vm635, 1, 0
  %v668 = vsel %vm636, 1, 0
  %v669 = vsel %vm637, 1, 0
  %v670 = vsel %vm638, 1, 0
  %v671 = vsel %vm639, 1, 0
  %v672 = vsel %vm640, 1, 0
  %v673 = vsel %vm641, 1, 0
  %v674 = vsel %vm642, 1, 0
  %v675 = vsel %vm643, 1, 0
  %v676 = vsel %vm644, 1, 0
  %v677 = vsel %vm645, 1, 0
  %v678 = vsel %vm646, 1, 0
  %v679 = vsel %vm647, 1, 0
  %v680 = vsel %vm648, 1, 0
  %v681 = vsel %vm649, 1, 0
  %v682 = vsel %vm650, 1, 0
  %v683 = vsel %vm651, 1, 0
  %v684 = vsel %vm652, 1, 0
  %v685 = vsel %vm653, 1, 0
  %v686 = vsel %vm654, 1, 0
  %v687 = vsel %vm655, 1, 0
  %v688 = vsel %vm656, 1, 0
  %v689 = vsel %vm657, 1, 0
  %v690 = vsel %vm658, 1, 0
  %v691 = vsel %vm659, 1, 0
  %v692 = vsel %vm660, 1, 0
  %v693 = vsel %vm661, 1, 0
  %v694 = vsel %vm662, 1, 0
  %v695 = vsel %vm663, 1, 0
  %v696 = vsel %vm664, 1, 0
  %v697 = vsel %vm665, 1, 0
  %v698 = vsel %vm666, 1, 0
  %v699 = vcvt.s32.f32 %v667
  %v700 = vcvt.s32.f32 %v668
  %v701 = vcvt.s32.f32 %v669
  %v702 = vcvt.s32.f32 %v670
  %v703 = vcvt.s32.f32 %v671
  %v704 = vcvt.s32.f32 %v672
  %v705 = vcvt.s32.f32 %v673
  %v706 = vcvt.s32.f32 %v674
  %v707 = vcvt.s32.f32 %v675
  %v708 = vcvt.s32.f32 %v676
  %v709 = vcvt.s32.f32 %v677
  %v710 = vcvt.s32.f32 %v678
  %v711 = vcvt.s32.f32 %v679
  %v712 = vcvt.s32.f32 %v680
  %v713 = vcvt.s32.f32 %v681
  %v714 = vcvt.s32.f32 %v682
  %v715 = vcvt.s32.f32 %v683
  %v716 = vcvt.s32.f32 %v684
  %v717 = vcvt.s32.f32 %v685
  %v718 = vcvt.s32.f32 %v686
  %v719 = vcvt.s32.f32 %v687
  %v720 = vcvt.s32.f32 %v688
  %v721 = vcvt.s32.f32 %v689
  %v722 = vcvt.s32.f32 %v690
  %v723 = vcvt.s32.f32 %v691
  %v724 = vcvt.s32.f32 %v692
  %v725 = vcvt.s32.f32 %v693
  %v726 = vcvt.s32.f32 %v694
  %v727 = vcvt.s32.f32 %v695
  %v728 = vcvt.s32.f32 %v696
  %v729 = vcvt.s32.f32 %v697
  %v730 = vcvt.s32.f32 %v698
  %v731 = vld [vmem:[%s3] sm:$0xff]
  %v732 = vld [vmem:[%s3 + $0x8] sm:$0xff]
  %v733 = vld [vmem:[%s3 + $0x10] sm:$0xff]
  %v734 = vld [vmem:[%s3 + $0x18] sm:$0xff]
  %v735 = vld [vmem:[%s3 + $0x20] sm:$0xff]
  %v736 = vld [vmem:[%s3 + $0x28] sm:$0xff]
  %v737 = vld [vmem:[%s3 + $0x30] sm:$0xff]
  %v738 = vld [vmem:[%s3 + $0x38] sm:$0xff]
  %v739 = vld [vmem:[%s3 + $0x40] sm:$0xff]
  %v740 = vld [vmem:[%s3 + $0x48] sm:$0xff]
  %v741 = vld [vmem:[%s3 + $0x50] sm:$0xff]
  %v742 = vld [vmem:[%s3 + $0x58] sm:$0xff]
  %v743 = vld [vmem:[%s3 + $0x60] sm:$0xff]
  %v744 = vld [vmem:[%s3 + $0x68] sm:$0xff]
  %v745 = vld [vmem:[%s3 + $0x70] sm:$0xff]
  %v746 = vld [vmem:[%s3 + $0x78] sm:$0xff]
  %v747 = vld [vmem:[%s5] sm:$0x1]
  %v749 = vlaneseq
  %v750 = vshrl.u32 %v749, 7
  %v751 = vsub.s32 0, %v750
  %v752 = vrot.slane %v747, %v751
  %754 = vmatprep.subr.mxu0 0.0
  %755 = vmatpush1.msra.mxu0 %v731
  %756 = vmatprep.subr.mxu0 0.0
  %757 = vmatpush1.msra.mxu0 %v732
  %758 = vmatprep.subr.mxu0 0.0
  %759 = vmatpush1.msra.mxu0 %v733
  %760 = vmatprep.subr.mxu0 0.0
  %761 = vmatpush1.msra.mxu0 %v734
  %762 = vmatprep.subr.mxu0 0.0
  %763 = vmatpush1.msra.mxu0 %v735
  %764 = vmatprep.subr.mxu0 0.0
  %765 = vmatpush1.msra.mxu0 %v736
  %766 = vmatprep.subr.mxu0 0.0
  %767 = vmatpush1.msra.mxu0 %v737
  %768 = vmatprep.subr.mxu0 0.0
  %769 = vmatpush1.msra.mxu0 %v738
  %770 = vmatprep.subr.mxu0 0.0
  %771 = vmatpush1.msra.mxu0 %v739
  %772 = vmatprep.subr.mxu0 0.0
  %773 = vmatpush1.msra.mxu0 %v740
  %774 = vmatprep.subr.mxu0 0.0
  %775 = vmatpush1.msra.mxu0 %v741
  %776 = vmatprep.subr.mxu0 0.0
  %777 = vmatpush1.msra.mxu0 %v742
  %778 = vmatprep.subr.mxu0 0.0
  %779 = vmatpush1.msra.mxu0 %v743
  %780 = vmatprep.subr.mxu0 0.0
  %781 = vmatpush1.msra.mxu0 %v744
  %782 = vmatprep.subr.mxu0 0.0
  %783 = vmatpush1.msra.mxu0 %v745
  %784 = vmatprep.subr.mxu0 0.0
  %785 = vmatpush1.msra.mxu0 %v746
  %786 = vmatprep.subr.mxu0 0.0
  %787 = vmatpush1.msra.mxu0 0.0
  %788 = vmatprep.subr.mxu0 0.0
  %789 = vmatpush1.msra.mxu0 0.0
  %790 = vmatprep.subr.mxu0 0.0
  %791 = vmatpush1.msra.mxu0 0.0
  %792 = vmatprep.subr.mxu0 0.0
  %793 = vmatpush1.msra.mxu0 0.0
  %794 = vmatprep.subr.mxu0 0.0
  %795 = vmatpush1.msra.mxu0 0.0
  %796 = vmatprep.subr.mxu0 0.0
  %797 = vmatpush1.msra.mxu0 0.0
  %798 = vmatprep.subr.mxu0 0.0
  %799 = vmatpush1.msra.mxu0 0.0
  %800 = vmatprep.subr.mxu0 0.0
  %801 = vmatpush1.msra.mxu0 0.0
  %802 = vmatprep.subr.mxu0 0.0
  %803 = vmatpush1.msra.mxu0 0.0
  %804 = vmatprep.subr.mxu0 0.0
  %805 = vmatpush1.msra.mxu0 0.0
  %806 = vmatprep.subr.mxu0 0.0
  %807 = vmatpush1.msra.mxu0 0.0
  %808 = vmatprep.subr.mxu0 0.0
  %809 = vmatpush1.msra.mxu0 0.0
  %810 = vmatprep.subr.mxu0 0.0
  %811 = vmatpush1.msra.mxu0 0.0
  %812 = vmatprep.subr.mxu0 0.0
  %813 = vmatpush1.msra.mxu0 0.0
  %814 = vmatprep.subr.mxu0 0.0
  %815 = vmatpush1.msra.mxu0 0.0
  %816 = vmatprep.subr.mxu0 0.0
  %817 = vmatpush1.msra.mxu0 0.0
  %818 = vmatprep.mubr.f32.mxu0 0.0
  %819 = vmatmul.mubr.f32.gmra.mrb[0].mxu0 %v699
  %v820 = vpop.f32.mrb[0].mxu0
  %v821 = vadd.f32 %v752, %v820
  %v822 = vpop.f32.mrb[0].mxu0
  %823 = vmatprep.mubr.f32.mxu0 0.0
  %824 = vmatmul.mubr.f32.gmra.mrb[0].mxu0 %v700
  %v825 = vpop.f32.mrb[0].mxu0
  %v826 = vadd.f32 %v752, %v825
  %v827 = vpop.f32.mrb[0].mxu0
  %828 = vmatprep.mubr.f32.mxu0 0.0
  %829 = vmatmul.mubr.f32.gmra.mrb[0].mxu0 %v701
  %v830 = vpop.f32.mrb[0].mxu0
  %v831 = vadd.f32 %v752, %v830
  %v832 = vpop.f32.mrb[0].mxu0
  %833 = vmatprep.mubr.f32.mxu0 0.0
  %834 = vmatmul.mubr.f32.gmra.mrb[0].mxu0 %v702
  %v835 = vpop.f32.mrb[0].mxu0
  %v836 = vadd.f32 %v752, %v835
  %v837 = vpop.f32.mrb[0].mxu0
  %838 = vmatprep.mubr.f32.mxu0 0.0
  %839 = vmatmul.mubr.f32.gmra.mrb[0].mxu0 %v703
  %v840 = vpop.f32.mrb[0].mxu0
  %v841 = vadd.f32 %v752, %v840
  %v842 = vpop.f32.mrb[0].mxu0
  %843 = vmatprep.mubr.f32.mxu0 0.0
  %844 = vmatmul.mubr.f32.gmra.mrb[0].mxu0 %v704
  %v845 = vpop.f32.mrb[0].mxu0
  %v846 = vadd.f32 %v752, %v845
  %v847 = vpop.f32.mrb[0].mxu0
  %848 = vmatprep.mubr.f32.mxu0 0.0
  %849 = vmatmul.mubr.f32.gmra.mrb[0].mxu0 %v705
  %v850 = vpop.f32.mrb[0].mxu0
  %v851 = vadd.f32 %v752, %v850
  %v852 = vpop.f32.mrb[0].mxu0
  %853 = vmatprep.mubr.f32.mxu0 0.0
  %854 = vmatmul.mubr.f32.gmra.mrb[0].mxu0 %v706
  %v855 = vpop.f32.mrb[0].mxu0
  %v856 = vadd.f32 %v752, %v855
  %v857 = vpop.f32.mrb[0].mxu0
  %858 = vmatprep.mubr.f32.mxu0 0.0
  %859 = vmatmul.mubr.f32.gmra.mrb[0].mxu0 %v707
  %v860 = vpop.f32.mrb[0].mxu0
  %v861 = vadd.f32 %v752, %v860
  %v862 = vpop.f32.mrb[0].mxu0
  %863 = vmatprep.mubr.f32.mxu0 0.0
  %864 = vmatmul.mubr.f32.gmra.mrb[0].mxu0 %v708
  %v865 = vpop.f32.mrb[0].mxu0
  %v866 = vadd.f32 %v752, %v865
  %v867 = vpop.f32.mrb[0].mxu0
  %868 = vmatprep.mubr.f32.mxu0 0.0
  %869 = vmatmul.mubr.f32.gmra.mrb[0].mxu0 %v709
  %v870 = vpop.f32.mrb[0].mxu0
  %v871 = vadd.f32 %v752, %v870
  %v872 = vpop.f32.mrb[0].mxu0
  %873 = vmatprep.mubr.f32.mxu0 0.0
  %874 = vmatmul.mubr.f32.gmra.mrb[0].mxu0 %v710
  %v875 = vpop.f32.mrb[0].mxu0
  %v876 = vadd.f32 %v752, %v875
  %v877 = vpop.f32.mrb[0].mxu0
  %878 = vmatprep.mubr.f32.mxu0 0.0
  %879 = vmatmul.mubr.f32.gmra.mrb[0].mxu0 %v711
  %v880 = vpop.f32.mrb[0].mxu0
  %v881 = vadd.f32 %v752, %v880
  %v882 = vpop.f32.mrb[0].mxu0
  %883 = vmatprep.mubr.f32.mxu0 0.0
  %884 = vmatmul.mubr.f32.gmra.mrb[0].mxu0 %v712
  %v885 = vpop.f32.mrb[0].mxu0
  %v886 = vadd.f32 %v752, %v885
  %v887 = vpop.f32.mrb[0].mxu0
  %888 = vmatprep.mubr.f32.mxu0 0.0
  %889 = vmatmul.mubr.f32.gmra.mrb[0].mxu0 %v713
  %v890 = vpop.f32.mrb[0].mxu0
  %v891 = vadd.f32 %v752, %v890
  %v892 = vpop.f32.mrb[0].mxu0
  %893 = vmatprep.mubr.f32.mxu0 0.0
  %894 = vmatmul.mubr.f32.gmra.mrb[0].mxu0 %v714
  %v895 = vpop.f32.mrb[0].mxu0
  %v896 = vadd.f32 %v752, %v895
  %v897 = vpop.f32.mrb[0].mxu0
  %898 = vmatprep.mubr.f32.mxu0 0.0
  %899 = vmatmul.mubr.f32.gmra.mrb[0].mxu0 %v715
  %v900 = vpop.f32.mrb[0].mxu0
  %v901 = vadd.f32 %v752, %v900
  %v902 = vpop.f32.mrb[0].mxu0
  %903 = vmatprep.mubr.f32.mxu0 0.0
  %904 = vmatmul.mubr.f32.gmra.mrb[0].mxu0 %v716
  %v905 = vpop.f32.mrb[0].mxu0
  %v906 = vadd.f32 %v752, %v905
  %v907 = vpop.f32.mrb[0].mxu0
  %908 = vmatprep.mubr.f32.mxu0 0.0
  %909 = vmatmul.mubr.f32.gmra.mrb[0].mxu0 %v717
  %v910 = vpop.f32.mrb[0].mxu0
  %v911 = vadd.f32 %v752, %v910
  %v912 = vpop.f32.mrb[0].mxu0
  %913 = vmatprep.mubr.f32.mxu0 0.0
  %914 = vmatmul.mubr.f32.gmra.mrb[0].mxu0 %v718
  %v915 = vpop.f32.mrb[0].mxu0
  %v916 = vadd.f32 %v752, %v915
  %v917 = vpop.f32.mrb[0].mxu0
  %918 = vmatprep.mubr.f32.mxu0 0.0
  %919 = vmatmul.mubr.f32.gmra.mrb[0].mxu0 %v719
  %v920 = vpop.f32.mrb[0].mxu0
  %v921 = vadd.f32 %v752, %v920
  %v922 = vpop.f32.mrb[0].mxu0
  %923 = vmatprep.mubr.f32.mxu0 0.0
  %924 = vmatmul.mubr.f32.gmra.mrb[0].mxu0 %v720
  %v925 = vpop.f32.mrb[0].mxu0
  %v926 = vadd.f32 %v752, %v925
  %v927 = vpop.f32.mrb[0].mxu0
  %928 = vmatprep.mubr.f32.mxu0 0.0
  %929 = vmatmul.mubr.f32.gmra.mrb[0].mxu0 %v721
  %v930 = vpop.f32.mrb[0].mxu0
  %v931 = vadd.f32 %v752, %v930
  %v932 = vpop.f32.mrb[0].mxu0
  %933 = vmatprep.mubr.f32.mxu0 0.0
  %934 = vmatmul.mubr.f32.gmra.mrb[0].mxu0 %v722
  %v935 = vpop.f32.mrb[0].mxu0
  %v936 = vadd.f32 %v752, %v935
  %v937 = vpop.f32.mrb[0].mxu0
  %938 = vmatprep.mubr.f32.mxu0 0.0
  %939 = vmatmul.mubr.f32.gmra.mrb[0].mxu0 %v723
  %v940 = vpop.f32.mrb[0].mxu0
  %v941 = vadd.f32 %v752, %v940
  %v942 = vpop.f32.mrb[0].mxu0
  %943 = vmatprep.mubr.f32.mxu0 0.0
  %944 = vmatmul.mubr.f32.gmra.mrb[0].mxu0 %v724
  %v945 = vpop.f32.mrb[0].mxu0
  %v946 = vadd.f32 %v752, %v945
  %v947 = vpop.f32.mrb[0].mxu0
  %948 = vmatprep.mubr.f32.mxu0 0.0
  %949 = vmatmul.mubr.f32.gmra.mrb[0].mxu0 %v725
  %v950 = vpop.f32.mrb[0].mxu0
  %v951 = vadd.f32 %v752, %v950
  %v952 = vpop.f32.mrb[0].mxu0
  %953 = vmatprep.mubr.f32.mxu0 0.0
  %954 = vmatmul.mubr.f32.gmra.mrb[0].mxu0 %v726
  %v955 = vpop.f32.mrb[0].mxu0
  %v956 = vadd.f32 %v752, %v955
  %v957 = vpop.f32.mrb[0].mxu0
  %958 = vmatprep.mubr.f32.mxu0 0.0
  %959 = vmatmul.mubr.f32.gmra.mrb[0].mxu0 %v727
  %v960 = vpop.f32.mrb[0].mxu0
  %v961 = vadd.f32 %v752, %v960
  %v962 = vpop.f32.mrb[0].mxu0
  %963 = vmatprep.mubr.f32.mxu0 0.0
  %964 = vmatmul.mubr.f32.gmra.mrb[0].mxu0 %v728
  %v965 = vpop.f32.mrb[0].mxu0
  %v966 = vadd.f32 %v752, %v965
  %v967 = vpop.f32.mrb[0].mxu0
  %968 = vmatprep.mubr.f32.mxu0 0.0
  %969 = vmatmul.mubr.f32.gmra.mrb[0].mxu0 %v729
  %v970 = vpop.f32.mrb[0].mxu0
  %v971 = vadd.f32 %v752, %v970
  %v972 = vpop.f32.mrb[0].mxu0
  %973 = vmatprep.mubr.f32.mxu0 0.0
  %974 = vmatmul.mubr.f32.gmra.mrb[0].mxu0 %v730
  %v975 = vpop.f32.mrb[0].mxu0
  %v976 = vadd.f32 %v752, %v975
  %v977 = vpop.f32.mrb[0].mxu0
  %978 = vdwg.mxu0
  %1011 = vrot.lane.b32.xlu0 %v821, 32
  %v1012 = vpop.permute.xlu0 %1011
  %1013 = vrot.lane.b32.xlu0 %v826, 32
  %v1014 = vpop.permute.xlu0 %1013
  %1015 = vrot.lane.b32.xlu0 %v831, 32
  %v1016 = vpop.permute.xlu0 %1015
  %1017 = vrot.lane.b32.xlu0 %v836, 32
  %v1018 = vpop.permute.xlu0 %1017
  %1019 = vrot.lane.b32.xlu0 %v841, 32
  %v1020 = vpop.permute.xlu0 %1019
  %1021 = vrot.lane.b32.xlu0 %v846, 32
  %v1022 = vpop.permute.xlu0 %1021
  %1023 = vrot.lane.b32.xlu0 %v851, 32
  %v1024 = vpop.permute.xlu0 %1023
  %1025 = vrot.lane.b32.xlu0 %v856, 32
  %v1026 = vpop.permute.xlu0 %1025
  %1027 = vrot.lane.b32.xlu0 %v861, 32
  %v1028 = vpop.permute.xlu0 %1027
  %1029 = vrot.lane.b32.xlu0 %v866, 32
  %v1030 = vpop.permute.xlu0 %1029
  %1031 = vrot.lane.b32.xlu0 %v871, 32
  %v1032 = vpop.permute.xlu0 %1031
  %1033 = vrot.lane.b32.xlu0 %v876, 32
  %v1034 = vpop.permute.xlu0 %1033
  %1035 = vrot.lane.b32.xlu0 %v881, 32
  %v1036 = vpop.permute.xlu0 %1035
  %1037 = vrot.lane.b32.xlu0 %v886, 32
  %v1038 = vpop.permute.xlu0 %1037
  %1039 = vrot.lane.b32.xlu0 %v891, 32
  %v1040 = vpop.permute.xlu0 %1039
  %1041 = vrot.lane.b32.xlu0 %v896, 32
  %v1042 = vpop.permute.xlu0 %1041
  %1043 = vrot.lane.b32.xlu0 %v901, 32
  %v1044 = vpop.permute.xlu0 %1043
  %1045 = vrot.lane.b32.xlu0 %v906, 32
  %v1046 = vpop.permute.xlu0 %1045
  %1047 = vrot.lane.b32.xlu0 %v911, 32
  %v1048 = vpop.permute.xlu0 %1047
  %1049 = vrot.lane.b32.xlu0 %v916, 32
  %v1050 = vpop.permute.xlu0 %1049
  %1051 = vrot.lane.b32.xlu0 %v921, 32
  %v1052 = vpop.permute.xlu0 %1051
  %1053 = vrot.lane.b32.xlu0 %v926, 32
  %v1054 = vpop.permute.xlu0 %1053
  %1055 = vrot.lane.b32.xlu0 %v931, 32
  %v1056 = vpop.permute.xlu0 %1055
  %1057 = vrot.lane.b32.xlu0 %v936, 32
  %v1058 = vpop.permute.xlu0 %1057
  %1059 = vrot.lane.b32.xlu0 %v941, 32
  %v1060 = vpop.permute.xlu0 %1059
  %1061 = vrot.lane.b32.xlu0 %v946, 32
  %v1062 = vpop.permute.xlu0 %1061
  %1063 = vrot.lane.b32.xlu0 %v951, 32
  %v1064 = vpop.permute.xlu0 %1063
  %1065 = vrot.lane.b32.xlu0 %v956, 32
  %v1066 = vpop.permute.xlu0 %1065
  %1067 = vrot.lane.b32.xlu0 %v961, 32
  %v1068 = vpop.permute.xlu0 %1067
  %1069 = vrot.lane.b32.xlu0 %v966, 32
  %v1070 = vpop.permute.xlu0 %1069
  %1071 = vrot.lane.b32.xlu0 %v971, 32
  %v1072 = vpop.permute.xlu0 %1071
  %1073 = vrot.lane.b32.xlu0 %v976, 32
  %v1074 = vpop.permute.xlu0 %1073
  %vm1107 = vcmask 261120
  %v1108 = vsel %vm1107, %v349, %v1012
  %v1109 = vsel %vm1107, %v354, %v1014
  %v1110 = vsel %vm1107, %v359, %v1016
  %v1111 = vsel %vm1107, %v364, %v1018
  %v1112 = vsel %vm1107, %v369, %v1020
  %v1113 = vsel %vm1107, %v374, %v1022
  %v1114 = vsel %vm1107, %v379, %v1024
  %v1115 = vsel %vm1107, %v384, %v1026
  %v1116 = vsel %vm1107, %v389, %v1028
  %v1117 = vsel %vm1107, %v394, %v1030
  %v1118 = vsel %vm1107, %v399, %v1032
  %v1119 = vsel %vm1107, %v404, %v1034
  %v1120 = vsel %vm1107, %v409, %v1036
  %v1121 = vsel %vm1107, %v414, %v1038
  %v1122 = vsel %vm1107, %v419, %v1040
  %v1123 = vsel %vm1107, %v424, %v1042
  %v1124 = vsel %vm1107, %v429, %v1044
  %v1125 = vsel %vm1107, %v434, %v1046
  %v1126 = vsel %vm1107, %v439, %v1048
  %v1127 = vsel %vm1107, %v444, %v1050
  %v1128 = vsel %vm1107, %v449, %v1052
  %v1129 = vsel %vm1107, %v454, %v1054
  %v1130 = vsel %vm1107, %v459, %v1056
  %v1131 = vsel %vm1107, %v464, %v1058
  %v1132 = vsel %vm1107, %v469, %v1060
  %v1133 = vsel %vm1107, %v474, %v1062
  %v1134 = vsel %vm1107, %v479, %v1064
  %v1135 = vsel %vm1107, %v484, %v1066
  %v1136 = vsel %vm1107, %v489, %v1068
  %v1137 = vsel %vm1107, %v494, %v1070
  %v1138 = vsel %vm1107, %v499, %v1072
  %v1139 = vsel %vm1107, %v504, %v1074
  %vm1140 = vcmask 523264
  %1141 = vst.msk [vmem:[#allocation2] sm:$0xff] %vm1140, %v1108
  %1142 = vst.msk [vmem:[#allocation2 + $0x8] sm:$0xff] %vm1140, %v1109
  %1143 = vst.msk [vmem:[#allocation2 + $0x10] sm:$0xff] %vm1140, %v1110
  %1144 = vst.msk [vmem:[#allocation2 + $0x18] sm:$0xff] %vm1140, %v1111
  %1145 = vst.msk [vmem:[#allocation2 + $0x20] sm:$0xff] %vm1140, %v1112
  %1146 = vst.msk [vmem:[#allocation2 + $0x28] sm:$0xff] %vm1140, %v1113
  %1147 = vst.msk [vmem:[#allocation2 + $0x30] sm:$0xff] %vm1140, %v1114
  %1148 = vst.msk [vmem:[#allocation2 + $0x38] sm:$0xff] %vm1140, %v1115
  %1149 = vst.msk [vmem:[#allocation2 + $0x40] sm:$0xff] %vm1140, %v1116
  %1150 = vst.msk [vmem:[#allocation2 + $0x48] sm:$0xff] %vm1140, %v1117
  %1151 = vst.msk [vmem:[#allocation2 + $0x50] sm:$0xff] %vm1140, %v1118
  %1152 = vst.msk [vmem:[#allocation2 + $0x58] sm:$0xff] %vm1140, %v1119
  %1153 = vst.msk [vmem:[#allocation2 + $0x60] sm:$0xff] %vm1140, %v1120
  %1154 = vst.msk [vmem:[#allocation2 + $0x68] sm:$0xff] %vm1140, %v1121
  %1155 = vst.msk [vmem:[#allocation2 + $0x70] sm:$0xff] %vm1140, %v1122
  %1156 = vst.msk [vmem:[#allocation2 + $0x78] sm:$0xff] %vm1140, %v1123
  %1157 = vst.msk [vmem:[#allocation2 + $0x80] sm:$0xff] %vm1140, %v1124
  %1158 = vst.msk [vmem:[#allocation2 + $0x88] sm:$0xff] %vm1140, %v1125
  %1159 = vst.msk [vmem:[#allocation2 + $0x90] sm:$0xff] %vm1140, %v1126
  %1160 = vst.msk [vmem:[#allocation2 + $0x98] sm:$0xff] %vm1140, %v1127
  %1161 = vst.msk [vmem:[#allocation2 + $0xa0] sm:$0xff] %vm1140, %v1128
  %1162 = vst.msk [vmem:[#allocation2 + $0xa8] sm:$0xff] %vm1140, %v1129
  %1163 = vst.msk [vmem:[#allocation2 + $0xb0] sm:$0xff] %vm1140, %v1130
  %1164 = vst.msk [vmem:[#allocation2 + $0xb8] sm:$0xff] %vm1140, %v1131
  %1165 = vst.msk [vmem:[#allocation2 + $0xc0] sm:$0xff] %vm1140, %v1132
  %1166 = vst.msk [vmem:[#allocation2 + $0xc8] sm:$0xff] %vm1140, %v1133
  %1167 = vst.msk [vmem:[#allocation2 + $0xd0] sm:$0xff] %vm1140, %v1134
  %1168 = vst.msk [vmem:[#allocation2 + $0xd8] sm:$0xff] %vm1140, %v1135
  %1169 = vst.msk [vmem:[#allocation2 + $0xe0] sm:$0xff] %vm1140, %v1136
  %1170 = vst.msk [vmem:[#allocation2 + $0xe8] sm:$0xff] %vm1140, %v1137
  %1171 = vst.msk [vmem:[#allocation2 + $0xf0] sm:$0xff] %vm1140, %v1138
  %1172 = vst.msk [vmem:[#allocation2 + $0xf8] sm:$0xff] %vm1140, %v1139
  %v1173 = vld [vmem:[%s6] sm:$0xff]
  %v1174 = vld [vmem:[%s6 + $0x8] sm:$0xff]
  %v1175 = vld [vmem:[%s6 + $0x10] sm:$0xff]
  %v1176 = vld [vmem:[%s6 + $0x18] sm:$0xff]
  %v1177 = vld [vmem:[%s6 + $0x20] sm:$0xff]
  %v1178 = vld [vmem:[%s6 + $0x28] sm:$0xff]
  %v1179 = vld [vmem:[%s6 + $0x30] sm:$0xff]
  %v1180 = vld [vmem:[%s6 + $0x38] sm:$0xff]
  %v1181 = vpack.c.bf16 %v1174, %v1173
  %v1182 = vpack.c.bf16 %v1176, %v1175
  %v1183 = vpack.c.bf16 %v1178, %v1177
  %v1184 = vpack.c.bf16 %v1180, %v1179
  %v1185 = vld [vmem:[#allocation2] sm:$0xff]
  %v1186 = vld [vmem:[#allocation2 + $0x8] sm:$0xff]
  %v1187 = vld [vmem:[#allocation2 + $0x10] sm:$0xff]
  %v1188 = vld [vmem:[#allocation2 + $0x18] sm:$0xff]
  %v1189 = vtanh.pop %v1185
  %v1190 = vtanh.pop %v1186
  %v1191 = vtanh.pop %v1187
  %v1192 = vtanh.pop %v1188
  %v1193 = vpack.c.bf16 %v1190, %v1189
  %v1194 = vpack.c.bf16 %v1192, %v1191
  %v1195 = vld [vmem:[#allocation2 + $0x20] sm:$0xff]
  %v1196 = vld [vmem:[#allocation2 + $0x28] sm:$0xff]
  %v1197 = vld [vmem:[#allocation2 + $0x30] sm:$0xff]
  %v1198 = vld [vmem:[#allocation2 + $0x38] sm:$0xff]
  %v1200 = vsel %vm1140, %v1193, 0
  %v1203 = vsel %vm1140, %v1194, 0
  %1205 = vmatprep.subr.bf16.mxu0 0
  %1206 = vmatpush1.bf16.msra.mxu0 %v1181
  %1207 = vmatprep.subr.bf16.mxu0 0
  %1208 = vmatpush1.bf16.msra.mxu0 %v1182
  %1209 = vmatprep.subr.bf16.mxu0 0
  %1210 = vmatpush1.bf16.msra.mxu0 %v1183
  %1211 = vmatprep.subr.bf16.mxu0 0
  %1212 = vmatpush1.bf16.msra.mxu0 %v1184
  %1213 = vmatprep.subr.bf16.mxu0 0
  %1214 = vmatpush1.bf16.msra.mxu0 0
  %1215 = vmatprep.subr.bf16.mxu0 0
  %1216 = vmatpush1.bf16.msra.mxu0 0
  %1217 = vmatprep.subr.bf16.mxu0 0
  %1218 = vmatpush1.bf16.msra.mxu0 0
  %1219 = vmatprep.subr.bf16.mxu0 0
  %1220 = vmatpush1.bf16.msra.mxu0 0
  %1221 = vmatprep.subr.bf16.mxu0 0
  %1222 = vmatpush1.bf16.msra.mxu0 0
  %1223 = vmatprep.subr.bf16.mxu0 0
  %1224 = vmatpush1.bf16.msra.mxu0 0
  %1225 = vmatprep.subr.bf16.mxu0 0
  %1226 = vmatpush1.bf16.msra.mxu0 0
  %1227 = vmatprep.subr.bf16.mxu0 0
  %1228 = vmatpush1.bf16.msra.mxu0 0
  %1229 = vmatprep.subr.bf16.mxu0 0
  %1230 = vmatpush1.bf16.msra.mxu0 0
  %1231 = vmatprep.subr.bf16.mxu0 0
  %1232 = vmatpush1.bf16.msra.mxu0 0
  %1233 = vmatprep.subr.bf16.mxu0 0
  %1234 = vmatpush1.bf16.msra.mxu0 0
  %1235 = vmatprep.subr.bf16.mxu0 0
  %1236 = vmatpush1.bf16.msra.mxu0 0
  %1237 = vmatprep.mubr.bf16.mxu0 0
  %1238 = vmatmul.mubr.bf16.gmra.mrb[0].mxu0 %v1200
  %v1239 = vpop.f32.mrb[0].mxu0
  %v1240 = vadd.f32 0.0, %v1239
  %v1241 = vpop.f32.mrb[0].mxu0
  %v1242 = vpop.f32.mrb[0].mxu0
  %v1243 = vadd.f32 0.0, %v1242
  %v1244 = vpop.f32.mrb[0].mxu0
  %1245 = vmatprep.mubr.bf16.mxu0 0
  %1246 = vmatmul.mubr.bf16.gmra.mrb[0].mxu0 %v1203
  %v1247 = vpop.f32.mrb[0].mxu0
  %v1248 = vadd.f32 0.0, %v1247
  %v1249 = vpop.f32.mrb[0].mxu0
  %v1250 = vpop.f32.mrb[0].mxu0
  %v1251 = vadd.f32 0.0, %v1250
  %v1252 = vpop.f32.mrb[0].mxu0
  %1253 = vdwg.mxu0
  %v1254 = vadd.f32 %v1195, %v1240
  %v1255 = vadd.f32 %v1196, %v1243
  %v1256 = vadd.f32 %v1197, %v1248
  %v1257 = vadd.f32 %v1198, %v1251
  %v1258 = vtanh.pop %v1254
  %v1259 = vtanh.pop %v1255
  %v1260 = vtanh.pop %v1256
  %v1261 = vtanh.pop %v1257
  %v1262 = vpack.c.bf16 %v1259, %v1258
  %v1263 = vpack.c.bf16 %v1261, %v1260
  %v1264 = vld [vmem:[#allocation2 + $0x40] sm:$0xff]
  %v1265 = vld [vmem:[#allocation2 + $0x48] sm:$0xff]
  %v1266 = vld [vmem:[#allocation2 + $0x50] sm:$0xff]
  %v1267 = vld [vmem:[#allocation2 + $0x58] sm:$0xff]
  %v1269 = vsel %vm1140, %v1262, 0
  %v1272 = vsel %vm1140, %v1263, 0
  %1274 = vmatprep.subr.bf16.mxu0 0
  %1275 = vmatpush1.bf16.msra.mxu0 %v1181
  %1276 = vmatprep.subr.bf16.mxu0 0
  %1277 = vmatpush1.bf16.msra.mxu0 %v1182
  %1278 = vmatprep.subr.bf16.mxu0 0
  %1279 = vmatpush1.bf16.msra.mxu0 %v1183
  %1280 = vmatprep.subr.bf16.mxu0 0
  %1281 = vmatpush1.bf16.msra.mxu0 %v1184
  %1282 = vmatprep.subr.bf16.mxu0 0
  %1283 = vmatpush1.bf16.msra.mxu0 0
  %1284 = vmatprep.subr.bf16.mxu0 0
  %1285 = vmatpush1.bf16.msra.mxu0 0
  %1286 = vmatprep.subr.bf16.mxu0 0
  %1287 = vmatpush1.bf16.msra.mxu0 0
  %1288 = vmatprep.subr.bf16.mxu0 0
  %1289 = vmatpush1.bf16.msra.mxu0 0
  %1290 = vmatprep.subr.bf16.mxu0 0
  %1291 = vmatpush1.bf16.msra.mxu0 0
  %1292 = vmatprep.subr.bf16.mxu0 0
  %1293 = vmatpush1.bf16.msra.mxu0 0
  %1294 = vmatprep.subr.bf16.mxu0 0
  %1295 = vmatpush1.bf16.msra.mxu0 0
  %1296 = vmatprep.subr.bf16.mxu0 0
  %1297 = vmatpush1.bf16.msra.mxu0 0
  %1298 = vmatprep.subr.bf16.mxu0 0
  %1299 = vmatpush1.bf16.msra.mxu0 0
  %1300 = vmatprep.subr.bf16.mxu0 0
  %1301 = vmatpush1.bf16.msra.mxu0 0
  %1302 = vmatprep.subr.bf16.mxu0 0
  %1303 = vmatpush1.bf16.msra.mxu0 0
  %1304 = vmatprep.subr.bf16.mxu0 0
  %1305 = vmatpush1.bf16.msra.mxu0 0
  %1306 = vmatprep.mubr.bf16.mxu0 0
  %1307 = vmatmul.mubr.bf16.gmra.mrb[0].mxu0 %v1269
  %v1308 = vpop.f32.mrb[0].mxu0
  %v1309 = vadd.f32 0.0, %v1308
  %v1310 = vpop.f32.mrb[0].mxu0
  %v1311 = vpop.f32.mrb[0].mxu0
  %v1312 = vadd.f32 0.0, %v1311
  %v1313 = vpop.f32.mrb[0].mxu0
  %1314 = vmatprep.mubr.bf16.mxu0 0
  %1315 = vmatmul.mubr.bf16.gmra.mrb[0].mxu0 %v1272
  %v1316 = vpop.f32.mrb[0].mxu0
  %v1317 = vadd.f32 0.0, %v1316
  %v1318 = vpop.f32.mrb[0].mxu0
  %v1319 = vpop.f32.mrb[0].mxu0
  %v1320 = vadd.f32 0.0, %v1319
  %v1321 = vpop.f32.mrb[0].mxu0
  %1322 = vdwg.mxu0
  %v1323 = vadd.f32 %v1264, %v1309
  %v1324 = vadd.f32 %v1265, %v1312
  %v1325 = vadd.f32 %v1266, %v1317
  %v1326 = vadd.f32 %v1267, %v1320
  %v1327 = vtanh.pop %v1323
  %v1328 = vtanh.pop %v1324
  %v1329 = vtanh.pop %v1325
  %v1330 = vtanh.pop %v1326
  %v1331 = vpack.c.bf16 %v1328, %v1327
  %v1332 = vpack.c.bf16 %v1330, %v1329
  %v1333 = vld [vmem:[#allocation2 + $0x60] sm:$0xff]
  %v1334 = vld [vmem:[#allocation2 + $0x68] sm:$0xff]
  %v1335 = vld [vmem:[#allocation2 + $0x70] sm:$0xff]
  %v1336 = vld [vmem:[#allocation2 + $0x78] sm:$0xff]
  %v1338 = vsel %vm1140, %v1331, 0
  %v1341 = vsel %vm1140, %v1332, 0
  %1343 = vmatprep.subr.bf16.mxu0 0
  %1344 = vmatpush1.bf16.msra.mxu0 %v1181
  %1345 = vmatprep.subr.bf16.mxu0 0
  %1346 = vmatpush1.bf16.msra.mxu0 %v1182
  %1347 = vmatprep.subr.bf16.mxu0 0
  %1348 = vmatpush1.bf16.msra.mxu0 %v1183
  %1349 = vmatprep.subr.bf16.mxu0 0
  %1350 = vmatpush1.bf16.msra.mxu0 %v1184
  %1351 = vmatprep.subr.bf16.mxu0 0
  %1352 = vmatpush1.bf16.msra.mxu0 0
  %1353 = vmatprep.subr.bf16.mxu0 0
  %1354 = vmatpush1.bf16.msra.mxu0 0
  %1355 = vmatprep.subr.bf16.mxu0 0
  %1356 = vmatpush1.bf16.msra.mxu0 0
  %1357 = vmatprep.subr.bf16.mxu0 0
  %1358 = vmatpush1.bf16.msra.mxu0 0
  %1359 = vmatprep.subr.bf16.mxu0 0
  %1360 = vmatpush1.bf16.msra.mxu0 0
  %1361 = vmatprep.subr.bf16.mxu0 0
  %1362 = vmatpush1.bf16.msra.mxu0 0
  %1363 = vmatprep.subr.bf16.mxu0 0
  %1364 = vmatpush1.bf16.msra.mxu0 0
  %1365 = vmatprep.subr.bf16.mxu0 0
  %1366 = vmatpush1.bf16.msra.mxu0 0
  %1367 = vmatprep.subr.bf16.mxu0 0
  %1368 = vmatpush1.bf16.msra.mxu0 0
  %1369 = vmatprep.subr.bf16.mxu0 0
  %1370 = vmatpush1.bf16.msra.mxu0 0
  %1371 = vmatprep.subr.bf16.mxu0 0
  %1372 = vmatpush1.bf16.msra.mxu0 0
  %1373 = vmatprep.subr.bf16.mxu0 0
  %1374 = vmatpush1.bf16.msra.mxu0 0
  %1375 = vmatprep.mubr.bf16.mxu0 0
  %1376 = vmatmul.mubr.bf16.gmra.mrb[0].mxu0 %v1338
  %v1377 = vpop.f32.mrb[0].mxu0
  %v1378 = vadd.f32 0.0, %v1377
  %v1379 = vpop.f32.mrb[0].mxu0
  %v1380 = vpop.f32.mrb[0].mxu0
  %v1381 = vadd.f32 0.0, %v1380
  %v1382 = vpop.f32.mrb[0].mxu0
  %1383 = vmatprep.mubr.bf16.mxu0 0
  %1384 = vmatmul.mubr.bf16.gmra.mrb[0].mxu0 %v1341
  %v1385 = vpop.f32.mrb[0].mxu0
  %v1386 = vadd.f32 0.0, %v1385
  %v1387 = vpop.f32.mrb[0].mxu0
  %v1388 = vpop.f32.mrb[0].mxu0
  %v1389 = vadd.f32 0.0, %v1388
  %v1390 = vpop.f32.mrb[0].mxu0
  %1391 = vdwg.mxu0
  %v1392 = vadd.f32 %v1333, %v1378
  %v1393 = vadd.f32 %v1334, %v1381
  %v1394 = vadd.f32 %v1335, %v1386
  %v1395 = vadd.f32 %v1336, %v1389
  %v1396 = vtanh.pop %v1392
  %v1397 = vtanh.pop %v1393
  %v1398 = vtanh.pop %v1394
  %v1399 = vtanh.pop %v1395
  %v1400 = vpack.c.bf16 %v1397, %v1396
  %v1401 = vpack.c.bf16 %v1399, %v1398
  %v1402 = vld [vmem:[#allocation2 + $0x80] sm:$0xff]
  %v1403 = vld [vmem:[#allocation2 + $0x88] sm:$0xff]
  %v1404 = vld [vmem:[#allocation2 + $0x90] sm:$0xff]
  %v1405 = vld [vmem:[#allocation2 + $0x98] sm:$0xff]
  %v1407 = vsel %vm1140, %v1400, 0
  %v1410 = vsel %vm1140, %v1401, 0
  %1412 = vmatprep.subr.bf16.mxu0 0
  %1413 = vmatpush1.bf16.msra.mxu0 %v1181
  %1414 = vmatprep.subr.bf16.mxu0 0
  %1415 = vmatpush1.bf16.msra.mxu0 %v1182
  %1416 = vmatprep.subr.bf16.mxu0 0
  %1417 = vmatpush1.bf16.msra.mxu0 %v1183
  %1418 = vmatprep.subr.bf16.mxu0 0
  %1419 = vmatpush1.bf16.msra.mxu0 %v1184
  %1420 = vmatprep.subr.bf16.mxu0 0
  %1421 = vmatpush1.bf16.msra.mxu0 0
  %1422 = vmatprep.subr.bf16.mxu0 0
  %1423 = vmatpush1.bf16.msra.mxu0 0
  %1424 = vmatprep.subr.bf16.mxu0 0
  %1425 = vmatpush1.bf16.msra.mxu0 0
  %1426 = vmatprep.subr.bf16.mxu0 0
  %1427 = vmatpush1.bf16.msra.mxu0 0
  %1428 = vmatprep.subr.bf16.mxu0 0
  %1429 = vmatpush1.bf16.msra.mxu0 0
  %1430 = vmatprep.subr.bf16.mxu0 0
  %1431 = vmatpush1.bf16.msra.mxu0 0
  %1432 = vmatprep.subr.bf16.mxu0 0
  %1433 = vmatpush1.bf16.msra.mxu0 0
  %1434 = vmatprep.subr.bf16.mxu0 0
  %1435 = vmatpush1.bf16.msra.mxu0 0
  %1436 = vmatprep.subr.bf16.mxu0 0
  %1437 = vmatpush1.bf16.msra.mxu0 0
  %1438 = vmatprep.subr.bf16.mxu0 0
  %1439 = vmatpush1.bf16.msra.mxu0 0
  %1440 = vmatprep.subr.bf16.mxu0 0
  %1441 = vmatpush1.bf16.msra.mxu0 0
  %1442 = vmatprep.subr.bf16.mxu0 0
  %1443 = vmatpush1.bf16.msra.mxu0 0
  %1444 = vmatprep.mubr.bf16.mxu0 0
  %1445 = vmatmul.mubr.bf16.gmra.mrb[0].mxu0 %v1407
  %v1446 = vpop.f32.mrb[0].mxu0
  %v1447 = vadd.f32 0.0, %v1446
  %v1448 = vpop.f32.mrb[0].mxu0
  %v1449 = vpop.f32.mrb[0].mxu0
  %v1450 = vadd.f32 0.0, %v1449
  %v1451 = vpop.f32.mrb[0].mxu0
  %1452 = vmatprep.mubr.bf16.mxu0 0
  %1453 = vmatmul.mubr.bf16.gmra.mrb[0].mxu0 %v1410
  %v1454 = vpop.f32.mrb[0].mxu0
  %v1455 = vadd.f32 0.0, %v1454
  %v1456 = vpop.f32.mrb[0].mxu0
  %v1457 = vpop.f32.mrb[0].mxu0
  %v1458 = vadd.f32 0.0, %v1457
  %v1459 = vpop.f32.mrb[0].mxu0
  %1460 = vdwg.mxu0
  %v1461 = vadd.f32 %v1402, %v1447
  %v1462 = vadd.f32 %v1403, %v1450
  %v1463 = vadd.f32 %v1404, %v1455
  %v1464 = vadd.f32 %v1405, %v1458
  %v1465 = vtanh.pop %v1461
  %v1466 = vtanh.pop %v1462
  %v1467 = vtanh.pop %v1463
  %v1468 = vtanh.pop %v1464
  %v1469 = vpack.c.bf16 %v1466, %v1465
  %v1470 = vpack.c.bf16 %v1468, %v1467
  %v1471 = vld [vmem:[#allocation2 + $0xa0] sm:$0xff]
  %v1472 = vld [vmem:[#allocation2 + $0xa8] sm:$0xff]
  %v1473 = vld [vmem:[#allocation2 + $0xb0] sm:$0xff]
  %v1474 = vld [vmem:[#allocation2 + $0xb8] sm:$0xff]
  %v1476 = vsel %vm1140, %v1469, 0
  %v1479 = vsel %vm1140, %v1470, 0
  %1481 = vmatprep.subr.bf16.mxu0 0
  %1482 = vmatpush1.bf16.msra.mxu0 %v1181
  %1483 = vmatprep.subr.bf16.mxu0 0
  %1484 = vmatpush1.bf16.msra.mxu0 %v1182
  %1485 = vmatprep.subr.bf16.mxu0 0
  %1486 = vmatpush1.bf16.msra.mxu0 %v1183
  %1487 = vmatprep.subr.bf16.mxu0 0
  %1488 = vmatpush1.bf16.msra.mxu0 %v1184
  %1489 = vmatprep.subr.bf16.mxu0 0
  %1490 = vmatpush1.bf16.msra.mxu0 0
  %1491 = vmatprep.subr.bf16.mxu0 0
  %1492 = vmatpush1.bf16.msra.mxu0 0
  %1493 = vmatprep.subr.bf16.mxu0 0
  %1494 = vmatpush1.bf16.msra.mxu0 0
  %1495 = vmatprep.subr.bf16.mxu0 0
  %1496 = vmatpush1.bf16.msra.mxu0 0
  %1497 = vmatprep.subr.bf16.mxu0 0
  %1498 = vmatpush1.bf16.msra.mxu0 0
  %1499 = vmatprep.subr.bf16.mxu0 0
  %1500 = vmatpush1.bf16.msra.mxu0 0
  %1501 = vmatprep.subr.bf16.mxu0 0
  %1502 = vmatpush1.bf16.msra.mxu0 0
  %1503 = vmatprep.subr.bf16.mxu0 0
  %1504 = vmatpush1.bf16.msra.mxu0 0
  %1505 = vmatprep.subr.bf16.mxu0 0
  %1506 = vmatpush1.bf16.msra.mxu0 0
  %1507 = vmatprep.subr.bf16.mxu0 0
  %1508 = vmatpush1.bf16.msra.mxu0 0
  %1509 = vmatprep.subr.bf16.mxu0 0
  %1510 = vmatpush1.bf16.msra.mxu0 0
  %1511 = vmatprep.subr.bf16.mxu0 0
  %1512 = vmatpush1.bf16.msra.mxu0 0
  %1513 = vmatprep.mubr.bf16.mxu0 0
  %1514 = vmatmul.mubr.bf16.gmra.mrb[0].mxu0 %v1476
  %v1515 = vpop.f32.mrb[0].mxu0
  %v1516 = vadd.f32 0.0, %v1515
  %v1517 = vpop.f32.mrb[0].mxu0
  %v1518 = vpop.f32.mrb[0].mxu0
  %v1519 = vadd.f32 0.0, %v1518
  %v1520 = vpop.f32.mrb[0].mxu0
  %1521 = vmatprep.mubr.bf16.mxu0 0
  %1522 = vmatmul.mubr.bf16.gmra.mrb[0].mxu0 %v1479
  %v1523 = vpop.f32.mrb[0].mxu0
  %v1524 = vadd.f32 0.0, %v1523
  %v1525 = vpop.f32.mrb[0].mxu0
  %v1526 = vpop.f32.mrb[0].mxu0
  %v1527 = vadd.f32 0.0, %v1526
  %v1528 = vpop.f32.mrb[0].mxu0
  %1529 = vdwg.mxu0
  %v1530 = vadd.f32 %v1471, %v1516
  %v1531 = vadd.f32 %v1472, %v1519
  %v1532 = vadd.f32 %v1473, %v1524
  %v1533 = vadd.f32 %v1474, %v1527
  %v1534 = vtanh.pop %v1530
  %v1535 = vtanh.pop %v1531
  %v1536 = vtanh.pop %v1532
  %v1537 = vtanh.pop %v1533
  %v1538 = vpack.c.bf16 %v1535, %v1534
  %v1539 = vpack.c.bf16 %v1537, %v1536
  %v1540 = vld [vmem:[#allocation2 + $0xc0] sm:$0xff]
  %v1541 = vld [vmem:[#allocation2 + $0xc8] sm:$0xff]
  %v1542 = vld [vmem:[#allocation2 + $0xd0] sm:$0xff]
  %v1543 = vld [vmem:[#allocation2 + $0xd8] sm:$0xff]
  %v1545 = vsel %vm1140, %v1538, 0
  %v1548 = vsel %vm1140, %v1539, 0
  %1550 = vmatprep.subr.bf16.mxu0 0
  %1551 = vmatpush1.bf16.msra.mxu0 %v1181
  %1552 = vmatprep.subr.bf16.mxu0 0
  %1553 = vmatpush1.bf16.msra.mxu0 %v1182
  %1554 = vmatprep.subr.bf16.mxu0 0
  %1555 = vmatpush1.bf16.msra.mxu0 %v1183
  %1556 = vmatprep.subr.bf16.mxu0 0
  %1557 = vmatpush1.bf16.msra.mxu0 %v1184
  %1558 = vmatprep.subr.bf16.mxu0 0
  %1559 = vmatpush1.bf16.msra.mxu0 0
  %1560 = vmatprep.subr.bf16.mxu0 0
  %1561 = vmatpush1.bf16.msra.mxu0 0
  %1562 = vmatprep.subr.bf16.mxu0 0
  %1563 = vmatpush1.bf16.msra.mxu0 0
  %1564 = vmatprep.subr.bf16.mxu0 0
  %1565 = vmatpush1.bf16.msra.mxu0 0
  %1566 = vmatprep.subr.bf16.mxu0 0
  %1567 = vmatpush1.bf16.msra.mxu0 0
  %1568 = vmatprep.subr.bf16.mxu0 0
  %1569 = vmatpush1.bf16.msra.mxu0 0
  %1570 = vmatprep.subr.bf16.mxu0 0
  %1571 = vmatpush1.bf16.msra.mxu0 0
  %1572 = vmatprep.subr.bf16.mxu0 0
  %1573 = vmatpush1.bf16.msra.mxu0 0
  %1574 = vmatprep.subr.bf16.mxu0 0
  %1575 = vmatpush1.bf16.msra.mxu0 0
  %1576 = vmatprep.subr.bf16.mxu0 0
  %1577 = vmatpush1.bf16.msra.mxu0 0
  %1578 = vmatprep.subr.bf16.mxu0 0
  %1579 = vmatpush1.bf16.msra.mxu0 0
  %1580 = vmatprep.subr.bf16.mxu0 0
  %1581 = vmatpush1.bf16.msra.mxu0 0
  %1582 = vmatprep.mubr.bf16.mxu0 0
  %1583 = vmatmul.mubr.bf16.gmra.mrb[0].mxu0 %v1545
  %v1584 = vpop.f32.mrb[0].mxu0
  %v1585 = vadd.f32 0.0, %v1584
  %v1586 = vpop.f32.mrb[0].mxu0
  %v1587 = vpop.f32.mrb[0].mxu0
  %v1588 = vadd.f32 0.0, %v1587
  %v1589 = vpop.f32.mrb[0].mxu0
  %1590 = vmatprep.mubr.bf16.mxu0 0
  %1591 = vmatmul.mubr.bf16.gmra.mrb[0].mxu0 %v1548
  %v1592 = vpop.f32.mrb[0].mxu0
  %v1593 = vadd.f32 0.0, %v1592
  %v1594 = vpop.f32.mrb[0].mxu0
  %v1595 = vpop.f32.mrb[0].mxu0
  %v1596 = vadd.f32 0.0, %v1595
  %v1597 = vpop.f32.mrb[0].mxu0
  %1598 = vdwg.mxu0
  %v1599 = vadd.f32 %v1540, %v1585
  %v1600 = vadd.f32 %v1541, %v1588
  %v1601 = vadd.f32 %v1542, %v1593
  %v1602 = vadd.f32 %v1543, %v1596
  %v1603 = vtanh.pop %v1599
  %v1604 = vtanh.pop %v1600
  %v1605 = vtanh.pop %v1601
  %v1606 = vtanh.pop %v1602
  %v1607 = vpack.c.bf16 %v1604, %v1603
  %v1608 = vpack.c.bf16 %v1606, %v1605
  %v1609 = vld [vmem:[#allocation2 + $0xe0] sm:$0xff]
  %v1610 = vld [vmem:[#allocation2 + $0xe8] sm:$0xff]
  %v1611 = vld [vmem:[#allocation2 + $0xf0] sm:$0xff]
  %v1612 = vld [vmem:[#allocation2 + $0xf8] sm:$0xff]
  %v1614 = vsel %vm1140, %v1607, 0
  %v1617 = vsel %vm1140, %v1608, 0
  %1619 = vmatprep.subr.bf16.mxu0 0
  %1620 = vmatpush1.bf16.msra.mxu0 %v1181
  %1621 = vmatprep.subr.bf16.mxu0 0
  %1622 = vmatpush1.bf16.msra.mxu0 %v1182
  %1623 = vmatprep.subr.bf16.mxu0 0
  %1624 = vmatpush1.bf16.msra.mxu0 %v1183
  %1625 = vmatprep.subr.bf16.mxu0 0
  %1626 = vmatpush1.bf16.msra.mxu0 %v1184
  %1627 = vmatprep.subr.bf16.mxu0 0
  %1628 = vmatpush1.bf16.msra.mxu0 0
  %1629 = vmatprep.subr.bf16.mxu0 0
  %1630 = vmatpush1.bf16.msra.mxu0 0
  %1631 = vmatprep.subr.bf16.mxu0 0
  %1632 = vmatpush1.bf16.msra.mxu0 0
  %1633 = vmatprep.subr.bf16.mxu0 0
  %1634 = vmatpush1.bf16.msra.mxu0 0
  %1635 = vmatprep.subr.bf16.mxu0 0
  %1636 = vmatpush1.bf16.msra.mxu0 0
  %1637 = vmatprep.subr.bf16.mxu0 0
  %1638 = vmatpush1.bf16.msra.mxu0 0
  %1639 = vmatprep.subr.bf16.mxu0 0
  %1640 = vmatpush1.bf16.msra.mxu0 0
  %1641 = vmatprep.subr.bf16.mxu0 0
  %1642 = vmatpush1.bf16.msra.mxu0 0
  %1643 = vmatprep.subr.bf16.mxu0 0
  %1644 = vmatpush1.bf16.msra.mxu0 0
  %1645 = vmatprep.subr.bf16.mxu0 0
  %1646 = vmatpush1.bf16.msra.mxu0 0
  %1647 = vmatprep.subr.bf16.mxu0 0
  %1648 = vmatpush1.bf16.msra.mxu0 0
  %1649 = vmatprep.subr.bf16.mxu0 0
  %1650 = vmatpush1.bf16.msra.mxu0 0
  %1651 = vmatprep.mubr.bf16.mxu0 0
  %1652 = vmatmul.mubr.bf16.gmra.mrb[0].mxu0 %v1614
  %v1653 = vpop.f32.mrb[0].mxu0
  %v1654 = vadd.f32 0.0, %v1653
  %v1655 = vpop.f32.mrb[0].mxu0
  %v1656 = vpop.f32.mrb[0].mxu0
  %v1657 = vadd.f32 0.0, %v1656
  %v1658 = vpop.f32.mrb[0].mxu0
  %1659 = vmatprep.mubr.bf16.mxu0 0
  %1660 = vmatmul.mubr.bf16.gmra.mrb[0].mxu0 %v1617
  %v1661 = vpop.f32.mrb[0].mxu0
  %v1662 = vadd.f32 0.0, %v1661
  %v1663 = vpop.f32.mrb[0].mxu0
  %v1664 = vpop.f32.mrb[0].mxu0
  %v1665 = vadd.f32 0.0, %v1664
  %v1666 = vpop.f32.mrb[0].mxu0
  %1667 = vdwg.mxu0
  %v1668 = vadd.f32 %v1609, %v1654
  %v1669 = vadd.f32 %v1610, %v1657
  %v1670 = vadd.f32 %v1611, %v1662
  %v1671 = vadd.f32 %v1612, %v1665
  %v1672 = vtanh.pop %v1668
  %v1673 = vtanh.pop %v1669
  %v1674 = vtanh.pop %v1670
  %v1675 = vtanh.pop %v1671
  %1680 = vrot.lane.b32.xlu0 %v1672, 96
  %v1681 = vpop.permute.xlu0 %1680
  %1682 = vrot.lane.b32.xlu0 %v1673, 96
  %v1683 = vpop.permute.xlu0 %1682
  %1684 = vrot.lane.b32.xlu0 %v1674, 96
  %v1685 = vpop.permute.xlu0 %1684
  %1686 = vrot.lane.b32.xlu0 %v1675, 96
  %v1687 = vpop.permute.xlu0 %1686
  %v1692 = vadd.f32 %v1189, %v1681
  %v1693 = vadd.f32 %v1190, %v1683
  %v1694 = vadd.f32 %v1191, %v1685
  %v1695 = vadd.f32 %v1192, %v1687
  %v1696 = vmul.f32 %v1692, 0.5
  %v1697 = vmul.f32 %v1693, 0.5
  %v1698 = vmul.f32 %v1694, 0.5
  %v1699 = vmul.f32 %v1695, 0.5
  %1704 = vrot.lane.b32.xlu0 %v1603, 96
  %v1705 = vpop.permute.xlu0 %1704
  %1706 = vrot.lane.b32.xlu0 %v1604, 96
  %v1707 = vpop.permute.xlu0 %1706
  %1708 = vrot.lane.b32.xlu0 %v1605, 96
  %v1709 = vpop.permute.xlu0 %1708
  %1710 = vrot.lane.b32.xlu0 %v1606, 96
  %v1711 = vpop.permute.xlu0 %1710
  %v1716 = vadd.f32 %v1258, %v1705
  %v1717 = vadd.f32 %v1259, %v1707
  %v1718 = vadd.f32 %v1260, %v1709
  %v1719 = vadd.f32 %v1261, %v1711
  %v1720 = vmul.f32 %v1716, 0.5
  %v1721 = vmul.f32 %v1717, 0.5
  %v1722 = vmul.f32 %v1718, 0.5
  %v1723 = vmul.f32 %v1719, 0.5
  %1728 = vrot.lane.b32.xlu0 %v1534, 96
  %v1729 = vpop.permute.xlu0 %1728
  %1730 = vrot.lane.b32.xlu0 %v1535, 96
  %v1731 = vpop.permute.xlu0 %1730
  %1732 = vrot.lane.b32.xlu0 %v1536, 96
  %v1733 = vpop.permute.xlu0 %1732
  %1734 = vrot.lane.b32.xlu0 %v1537, 96
  %v1735 = vpop.permute.xlu0 %1734
  %v1740 = vadd.f32 %v1327, %v1729
  %v1741 = vadd.f32 %v1328, %v1731
  %v1742 = vadd.f32 %v1329, %v1733
  %v1743 = vadd.f32 %v1330, %v1735
  %v1744 = vmul.f32 %v1740, 0.5
  %v1745 = vmul.f32 %v1741, 0.5
  %v1746 = vmul.f32 %v1742, 0.5
  %v1747 = vmul.f32 %v1743, 0.5
  %1752 = vrot.lane.b32.xlu0 %v1465, 96
  %v1753 = vpop.permute.xlu0 %1752
  %1754 = vrot.lane.b32.xlu0 %v1466, 96
  %v1755 = vpop.permute.xlu0 %1754
  %1756 = vrot.lane.b32.xlu0 %v1467, 96
  %v1757 = vpop.permute.xlu0 %1756
  %1758 = vrot.lane.b32.xlu0 %v1468, 96
  %v1759 = vpop.permute.xlu0 %1758
  %v1764 = vadd.f32 %v1396, %v1753
  %v1765 = vadd.f32 %v1397, %v1755
  %v1766 = vadd.f32 %v1398, %v1757
  %v1767 = vadd.f32 %v1399, %v1759
  %v1768 = vmul.f32 %v1764, 0.5
  %v1769 = vmul.f32 %v1765, 0.5
  %v1770 = vmul.f32 %v1766, 0.5
  %v1771 = vmul.f32 %v1767, 0.5
  %1776 = vrot.lane.b32.xlu0 %v1396, 96
  %v1777 = vpop.permute.xlu0 %1776
  %1778 = vrot.lane.b32.xlu0 %v1397, 96
  %v1779 = vpop.permute.xlu0 %1778
  %1780 = vrot.lane.b32.xlu0 %v1398, 96
  %v1781 = vpop.permute.xlu0 %1780
  %1782 = vrot.lane.b32.xlu0 %v1399, 96
  %v1783 = vpop.permute.xlu0 %1782
  %v1788 = vadd.f32 %v1465, %v1777
  %v1789 = vadd.f32 %v1466, %v1779
  %v1790 = vadd.f32 %v1467, %v1781
  %v1791 = vadd.f32 %v1468, %v1783
  %v1792 = vmul.f32 %v1788, 0.5
  %v1793 = vmul.f32 %v1789, 0.5
  %v1794 = vmul.f32 %v1790, 0.5
  %v1795 = vmul.f32 %v1791, 0.5
  %1800 = vrot.lane.b32.xlu0 %v1327, 96
  %v1801 = vpop.permute.xlu0 %1800
  %1802 = vrot.lane.b32.xlu0 %v1328, 96
  %v1803 = vpop.permute.xlu0 %1802
  %1804 = vrot.lane.b32.xlu0 %v1329, 96
  %v1805 = vpop.permute.xlu0 %1804
  %1806 = vrot.lane.b32.xlu0 %v1330, 96
  %v1807 = vpop.permute.xlu0 %1806
  %v1812 = vadd.f32 %v1534, %v1801
  %v1813 = vadd.f32 %v1535, %v1803
  %v1814 = vadd.f32 %v1536, %v1805
  %v1815 = vadd.f32 %v1537, %v1807
  %v1816 = vmul.f32 %v1812, 0.5
  %v1817 = vmul.f32 %v1813, 0.5
  %v1818 = vmul.f32 %v1814, 0.5
  %v1819 = vmul.f32 %v1815, 0.5
  %1824 = vrot.lane.b32.xlu0 %v1258, 96
  %v1825 = vpop.permute.xlu0 %1824
  %1826 = vrot.lane.b32.xlu0 %v1259, 96
  %v1827 = vpop.permute.xlu0 %1826
  %1828 = vrot.lane.b32.xlu0 %v1260, 96
  %v1829 = vpop.permute.xlu0 %1828
  %1830 = vrot.lane.b32.xlu0 %v1261, 96
  %v1831 = vpop.permute.xlu0 %1830
  %v1836 = vadd.f32 %v1603, %v1825
  %v1837 = vadd.f32 %v1604, %v1827
  %v1838 = vadd.f32 %v1605, %v1829
  %v1839 = vadd.f32 %v1606, %v1831
  %v1840 = vmul.f32 %v1836, 0.5
  %v1841 = vmul.f32 %v1837, 0.5
  %v1842 = vmul.f32 %v1838, 0.5
  %v1843 = vmul.f32 %v1839, 0.5
  %1848 = vrot.lane.b32.xlu0 %v1189, 96
  %v1849 = vpop.permute.xlu0 %1848
  %1850 = vrot.lane.b32.xlu0 %v1190, 96
  %v1851 = vpop.permute.xlu0 %1850
  %1852 = vrot.lane.b32.xlu0 %v1191, 96
  %v1853 = vpop.permute.xlu0 %1852
  %1854 = vrot.lane.b32.xlu0 %v1192, 96
  %v1855 = vpop.permute.xlu0 %1854
  %v1860 = vadd.f32 %v1672, %v1849
  %v1861 = vadd.f32 %v1673, %v1851
  %v1862 = vadd.f32 %v1674, %v1853
  %v1863 = vadd.f32 %v1675, %v1855
  %v1864 = vmul.f32 %v1860, 0.5
  %v1865 = vmul.f32 %v1861, 0.5
  %v1866 = vmul.f32 %v1862, 0.5
  %v1867 = vmul.f32 %v1863, 0.5
  %1872 = vrot.lane.b32.xlu0 %v1720, 32
  %v1873 = vpop.permute.xlu0 %1872
  %1874 = vrot.lane.b32.xlu0 %v1721, 32
  %v1875 = vpop.permute.xlu0 %1874
  %1876 = vrot.lane.b32.xlu0 %v1722, 32
  %v1877 = vpop.permute.xlu0 %1876
  %1878 = vrot.lane.b32.xlu0 %v1723, 32
  %v1879 = vpop.permute.xlu0 %1878
  %1888 = vrot.lane.b32.xlu0 %v1744, 64
  %v1889 = vpop.permute.xlu0 %1888
  %1890 = vrot.lane.b32.xlu0 %v1745, 64
  %v1891 = vpop.permute.xlu0 %1890
  %1892 = vrot.lane.b32.xlu0 %v1746, 64
  %v1893 = vpop.permute.xlu0 %1892
  %1894 = vrot.lane.b32.xlu0 %v1747, 64
  %v1895 = vpop.permute.xlu0 %1894
  %1904 = vrot.lane.b32.xlu0 %v1768, 96
  %v1905 = vpop.permute.xlu0 %1904
  %1906 = vrot.lane.b32.xlu0 %v1769, 96
  %v1907 = vpop.permute.xlu0 %1906
  %1908 = vrot.lane.b32.xlu0 %v1770, 96
  %v1909 = vpop.permute.xlu0 %1908
  %1910 = vrot.lane.b32.xlu0 %v1771, 96
  %v1911 = vpop.permute.xlu0 %1910
  %1920 = vrot.lane.b32.xlu0 %v1816, 32
  %v1921 = vpop.permute.xlu0 %1920
  %1922 = vrot.lane.b32.xlu0 %v1817, 32
  %v1923 = vpop.permute.xlu0 %1922
  %1924 = vrot.lane.b32.xlu0 %v1818, 32
  %v1925 = vpop.permute.xlu0 %1924
  %1926 = vrot.lane.b32.xlu0 %v1819, 32
  %v1927 = vpop.permute.xlu0 %1926
  %1936 = vrot.lane.b32.xlu0 %v1840, 64
  %v1937 = vpop.permute.xlu0 %1936
  %1938 = vrot.lane.b32.xlu0 %v1841, 64
  %v1939 = vpop.permute.xlu0 %1938
  %1940 = vrot.lane.b32.xlu0 %v1842, 64
  %v1941 = vpop.permute.xlu0 %1940
  %1942 = vrot.lane.b32.xlu0 %v1843, 64
  %v1943 = vpop.permute.xlu0 %1942
  %1952 = vrot.lane.b32.xlu0 %v1864, 96
  %v1953 = vpop.permute.xlu0 %1952
  %1954 = vrot.lane.b32.xlu0 %v1865, 96
  %v1955 = vpop.permute.xlu0 %1954
  %1956 = vrot.lane.b32.xlu0 %v1866, 96
  %v1957 = vpop.permute.xlu0 %1956
  %1958 = vrot.lane.b32.xlu0 %v1867, 96
  %v1959 = vpop.permute.xlu0 %1958
  %v1964 = vsel %vm1107, %v1696, %v1873
  %v1965 = vsel %vm1107, %v1697, %v1875
  %v1966 = vsel %vm1107, %v1698, %v1877
  %v1967 = vsel %vm1107, %v1699, %v1879
  %v1968 = vsel %vm1140, %v1964, %v1889
  %v1969 = vsel %vm1140, %v1965, %v1891
  %v1970 = vsel %vm1140, %v1966, %v1893
  %v1971 = vsel %vm1140, %v1967, %v1895
  %vm1972 = vcmask 785408
  %v1973 = vsel %vm1972, %v1968, %v1905
  %v1974 = vsel %vm1972, %v1969, %v1907
  %v1975 = vsel %vm1972, %v1970, %v1909
  %v1976 = vsel %vm1972, %v1971, %v1911
  %v1977 = vsel %vm1107, %v1792, %v1921
  %v1978 = vsel %vm1107, %v1793, %v1923
  %v1979 = vsel %vm1107, %v1794, %v1925
  %v1980 = vsel %vm1107, %v1795, %v1927
  %v1981 = vsel %vm1140, %v1977, %v1937
  %v1982 = vsel %vm1140, %v1978, %v1939
  %v1983 = vsel %vm1140, %v1979, %v1941
  %v1984 = vsel %vm1140, %v1980, %v1943
  %v1985 = vsel %vm1972, %v1981, %v1953
  %v1986 = vsel %vm1972, %v1982, %v1955
  %v1987 = vsel %vm1972, %v1983, %v1957
  %v1988 = vsel %vm1972, %v1984, %v1959
  %v1989 = vld [vmem:[%s7] sm:$0xff]
  %v1990 = vld [vmem:[%s7 + $0x8] sm:$0xff]
  %v1991 = vld [vmem:[%s7 + $0x10] sm:$0xff]
  %v1992 = vld [vmem:[%s7 + $0x18] sm:$0xff]
  %v1993 = vld [vmem:[%s7 + $0x20] sm:$0xff]
  %v1994 = vld [vmem:[%s7 + $0x28] sm:$0xff]
  %v1995 = vld [vmem:[%s7 + $0x30] sm:$0xff]
  %v1996 = vld [vmem:[%s7 + $0x38] sm:$0xff]
  %v1997 = vld [vmem:[%s7 + $0x40] sm:$0xff]
  %v1998 = vld [vmem:[%s7 + $0x48] sm:$0xff]
  %v1999 = vld [vmem:[%s7 + $0x50] sm:$0xff]
  %v2000 = vld [vmem:[%s7 + $0x58] sm:$0xff]
  %v2001 = vld [vmem:[%s7 + $0x60] sm:$0xff]
  %v2002 = vld [vmem:[%s7 + $0x68] sm:$0xff]
  %v2003 = vld [vmem:[%s7 + $0x70] sm:$0xff]
  %v2004 = vld [vmem:[%s7 + $0x78] sm:$0xff]
  %v2005 = vld [vmem:[%s7 + $0x80] sm:$0xff]
  %v2006 = vld [vmem:[%s7 + $0x88] sm:$0xff]
  %v2007 = vld [vmem:[%s7 + $0x90] sm:$0xff]
  %v2008 = vld [vmem:[%s7 + $0x98] sm:$0xff]
  %v2009 = vld [vmem:[%s7 + $0xa0] sm:$0xff]
  %v2010 = vld [vmem:[%s7 + $0xa8] sm:$0xff]
  %v2011 = vld [vmem:[%s7 + $0xb0] sm:$0xff]
  %v2012 = vld [vmem:[%s7 + $0xb8] sm:$0xff]
  %v2013 = vld [vmem:[%s7 + $0xc0] sm:$0xff]
  %v2014 = vld [vmem:[%s7 + $0xc8] sm:$0xff]
  %v2015 = vld [vmem:[%s7 + $0xd0] sm:$0xff]
  %v2016 = vld [vmem:[%s7 + $0xd8] sm:$0xff]
  %v2017 = vld [vmem:[%s7 + $0xe0] sm:$0xff]
  %v2018 = vld [vmem:[%s7 + $0xe8] sm:$0xff]
  %v2019 = vld [vmem:[%s7 + $0xf0] sm:$0xff]
  %v2020 = vld [vmem:[%s7 + $0xf8] sm:$0xff]
  %2021 = vmatprep.subr.mxu0 0.0
  %2022 = vmatpush1.msra.mxu0 %v1989
  %2023 = vmatprep.subr.mxu0 0.0
  %2024 = vmatpush1.msra.mxu0 %v1990
  %2025 = vmatprep.subr.mxu0 0.0
  %2026 = vmatpush1.msra.mxu0 %v1991
  %2027 = vmatprep.subr.mxu0 0.0
  %2028 = vmatpush1.msra.mxu0 %v1992
  %2029 = vmatprep.subr.mxu0 0.0
  %2030 = vmatpush1.msra.mxu0 %v1993
  %2031 = vmatprep.subr.mxu0 0.0
  %2032 = vmatpush1.msra.mxu0 %v1994
  %2033 = vmatprep.subr.mxu0 0.0
  %2034 = vmatpush1.msra.mxu0 %v1995
  %2035 = vmatprep.subr.mxu0 0.0
  %2036 = vmatpush1.msra.mxu0 %v1996
  %2037 = vmatprep.subr.mxu0 0.0
  %2038 = vmatpush1.msra.mxu0 %v1997
  %2039 = vmatprep.subr.mxu0 0.0
  %2040 = vmatpush1.msra.mxu0 %v1998
  %2041 = vmatprep.subr.mxu0 0.0
  %2042 = vmatpush1.msra.mxu0 %v1999
  %2043 = vmatprep.subr.mxu0 0.0
  %2044 = vmatpush1.msra.mxu0 %v2000
  %2045 = vmatprep.subr.mxu0 0.0
  %2046 = vmatpush1.msra.mxu0 %v2001
  %2047 = vmatprep.subr.mxu0 0.0
  %2048 = vmatpush1.msra.mxu0 %v2002
  %2049 = vmatprep.subr.mxu0 0.0
  %2050 = vmatpush1.msra.mxu0 %v2003
  %2051 = vmatprep.subr.mxu0 0.0
  %2052 = vmatpush1.msra.mxu0 %v2004
  %2053 = vmatprep.subr.mxu0 0.0
  %2054 = vmatpush1.msra.mxu0 %v2005
  %2055 = vmatprep.subr.mxu0 0.0
  %2056 = vmatpush1.msra.mxu0 %v2006
  %2057 = vmatprep.subr.mxu0 0.0
  %2058 = vmatpush1.msra.mxu0 %v2007
  %2059 = vmatprep.subr.mxu0 0.0
  %2060 = vmatpush1.msra.mxu0 %v2008
  %2061 = vmatprep.subr.mxu0 0.0
  %2062 = vmatpush1.msra.mxu0 %v2009
  %2063 = vmatprep.subr.mxu0 0.0
  %2064 = vmatpush1.msra.mxu0 %v2010
  %2065 = vmatprep.subr.mxu0 0.0
  %2066 = vmatpush1.msra.mxu0 %v2011
  %2067 = vmatprep.subr.mxu0 0.0
  %2068 = vmatpush1.msra.mxu0 %v2012
  %2069 = vmatprep.subr.mxu0 0.0
  %2070 = vmatpush1.msra.mxu0 %v2013
  %2071 = vmatprep.subr.mxu0 0.0
  %2072 = vmatpush1.msra.mxu0 %v2014
  %2073 = vmatprep.subr.mxu0 0.0
  %2074 = vmatpush1.msra.mxu0 %v2015
  %2075 = vmatprep.subr.mxu0 0.0
  %2076 = vmatpush1.msra.mxu0 %v2016
  %2077 = vmatprep.subr.mxu0 0.0
  %2078 = vmatpush1.msra.mxu0 %v2017
  %2079 = vmatprep.subr.mxu0 0.0
  %2080 = vmatpush1.msra.mxu0 %v2018
  %2081 = vmatprep.subr.mxu0 0.0
  %2082 = vmatpush1.msra.mxu0 %v2019
  %2083 = vmatprep.subr.mxu0 0.0
  %2084 = vmatpush1.msra.mxu0 %v2020
  %2085 = vmatprep.mubr.f32.mxu0 %v1985
  %2086 = vmatmul.mubr.f32.gmra.mrb[0].mxu0 %v1973
  %v2087 = vpop.f32.mrb[0].mxu0
  %v2088 = vadd.f32 0.0, %v2087
  %v2089 = vpop.f32.mrb[0].mxu0
  %2090 = vmatprep.mubr.f32.mxu0 %v1986
  %2091 = vmatmul.mubr.f32.gmra.mrb[0].mxu0 %v1974
  %v2092 = vpop.f32.mrb[0].mxu0
  %v2093 = vadd.f32 0.0, %v2092
  %v2094 = vpop.f32.mrb[0].mxu0
  %2095 = vmatprep.mubr.f32.mxu0 %v1987
  %2096 = vmatmul.mubr.f32.gmra.mrb[0].mxu0 %v1975
  %v2097 = vpop.f32.mrb[0].mxu0
  %v2098 = vadd.f32 0.0, %v2097
  %v2099 = vpop.f32.mrb[0].mxu0
  %2100 = vmatprep.mubr.f32.mxu0 %v1988
  %2101 = vmatmul.mubr.f32.gmra.mrb[0].mxu0 %v1976
  %v2102 = vpop.f32.mrb[0].mxu0
  %v2103 = vadd.f32 0.0, %v2102
  %v2104 = vpop.f32.mrb[0].mxu0
  %2105 = vdwg.mxu0
  %v2106 = vtanh.pop %v2088
  %v2107 = vtanh.pop %v2093
  %v2108 = vtanh.pop %v2098
  %v2109 = vtanh.pop %v2103
  %v2110 = vld [vmem:[%s8] sm:$0xff]
  %v2111 = vld [vmem:[%s8 + $0x8] sm:$0xff]
  %v2112 = vld [vmem:[%s8 + $0x10] sm:$0xff]
  %v2113 = vld [vmem:[%s8 + $0x18] sm:$0xff]
  %v2115 = vsel %vm1107, %v2106, 0
  %v2118 = vsel %vm1107, %v2107, 0
  %v2121 = vsel %vm1107, %v2108, 0
  %v2124 = vsel %vm1107, %v2109, 0
  %2126 = vmatprep.subr.mxu0 0.0
  %2127 = vmatpush1.msra.mxu0 %v2110
  %2128 = vmatprep.subr.mxu0 0.0
  %2129 = vmatpush1.msra.mxu0 %v2111
  %2130 = vmatprep.subr.mxu0 0.0
  %2131 = vmatpush1.msra.mxu0 %v2112
  %2132 = vmatprep.subr.mxu0 0.0
  %2133 = vmatpush1.msra.mxu0 %v2113
  %2134 = vmatprep.subr.mxu0 0.0
  %2135 = vmatpush1.msra.mxu0 0.0
  %2136 = vmatprep.subr.mxu0 0.0
  %2137 = vmatpush1.msra.mxu0 0.0
  %2138 = vmatprep.subr.mxu0 0.0
  %2139 = vmatpush1.msra.mxu0 0.0
  %2140 = vmatprep.subr.mxu0 0.0
  %2141 = vmatpush1.msra.mxu0 0.0
  %2142 = vmatprep.subr.mxu0 0.0
  %2143 = vmatpush1.msra.mxu0 0.0
  %2144 = vmatprep.subr.mxu0 0.0
  %2145 = vmatpush1.msra.mxu0 0.0
  %2146 = vmatprep.subr.mxu0 0.0
  %2147 = vmatpush1.msra.mxu0 0.0
  %2148 = vmatprep.subr.mxu0 0.0
  %2149 = vmatpush1.msra.mxu0 0.0
  %2150 = vmatprep.subr.mxu0 0.0
  %2151 = vmatpush1.msra.mxu0 0.0
  %2152 = vmatprep.subr.mxu0 0.0
  %2153 = vmatpush1.msra.mxu0 0.0
  %2154 = vmatprep.subr.mxu0 0.0
  %2155 = vmatpush1.msra.mxu0 0.0
  %2156 = vmatprep.subr.mxu0 0.0
  %2157 = vmatpush1.msra.mxu0 0.0
  %2158 = vmatprep.subr.mxu0 0.0
  %2159 = vmatpush1.msra.mxu0 0.0
  %2160 = vmatprep.subr.mxu0 0.0
  %2161 = vmatpush1.msra.mxu0 0.0
  %2162 = vmatprep.subr.mxu0 0.0
  %2163 = vmatpush1.msra.mxu0 0.0
  %2164 = vmatprep.subr.mxu0 0.0
  %2165 = vmatpush1.msra.mxu0 0.0
  %2166 = vmatprep.subr.mxu0 0.0
  %2167 = vmatpush1.msra.mxu0 0.0
  %2168 = vmatprep.subr.mxu0 0.0
  %2169 = vmatpush1.msra.mxu0 0.0
  %2170 = vmatprep.subr.mxu0 0.0
  %2171 = vmatpush1.msra.mxu0 0.0
  %2172 = vmatprep.subr.mxu0 0.0
  %2173 = vmatpush1.msra.mxu0 0.0
  %2174 = vmatprep.subr.mxu0 0.0
  %2175 = vmatpush1.msra.mxu0 0.0
  %2176 = vmatprep.subr.mxu0 0.0
  %2177 = vmatpush1.msra.mxu0 0.0
  %2178 = vmatprep.subr.mxu0 0.0
  %2179 = vmatpush1.msra.mxu0 0.0
  %2180 = vmatprep.subr.mxu0 0.0
  %2181 = vmatpush1.msra.mxu0 0.0
  %2182 = vmatprep.subr.mxu0 0.0
  %2183 = vmatpush1.msra.mxu0 0.0
  %2184 = vmatprep.subr.mxu0 0.0
  %2185 = vmatpush1.msra.mxu0 0.0
  %2186 = vmatprep.subr.mxu0 0.0
  %2187 = vmatpush1.msra.mxu0 0.0
  %2188 = vmatprep.subr.mxu0 0.0
  %2189 = vmatpush1.msra.mxu0 0.0
  %2190 = vmatprep.mubr.f32.mxu0 0.0
  %2191 = vmatmul.mubr.f32.gmra.mrb[0].mxu0 %v2115
  %v2192 = vpop.f32.mrb[0].mxu0
  %v2193 = vadd.f32 0.0, %v2192
  %v2194 = vpop.f32.mrb[0].mxu0
  %2195 = vmatprep.mubr.f32.mxu0 0.0
  %2196 = vmatmul.mubr.f32.gmra.mrb[0].mxu0 %v2118
  %v2197 = vpop.f32.mrb[0].mxu0
  %v2198 = vadd.f32 0.0, %v2197
  %v2199 = vpop.f32.mrb[0].mxu0
  %2200 = vmatprep.mubr.f32.mxu0 0.0
  %2201 = vmatmul.mubr.f32.gmra.mrb[0].mxu0 %v2121
  %v2202 = vpop.f32.mrb[0].mxu0
  %v2203 = vadd.f32 0.0, %v2202
  %v2204 = vpop.f32.mrb[0].mxu0
  %2205 = vmatprep.mubr.f32.mxu0 0.0
  %2206 = vmatmul.mubr.f32.gmra.mrb[0].mxu0 %v2124
  %v2207 = vpop.f32.mrb[0].mxu0
  %v2208 = vadd.f32 0.0, %v2207
  %v2209 = vpop.f32.mrb[0].mxu0
  %2210 = vdwg.mxu0
  %v2211 = vlaneseq
  %v2212 = vshrl.u32 %v2211, 7
  %v2213 = vadd.s32 %v2212, 8
  %v2214 = vadd.s32 %v2212, 16
  %v2215 = vadd.s32 %v2212, 24
  %v2216 = vmul.u32 %v34, 4
  %vm2217 = vcmp.ge.s32.totalorder %v2212, %v2216
  %vm2218 = vcmp.ge.s32.totalorder %v2213, %v2216
  %vm2219 = vcmp.ge.s32.totalorder %v2214, %v2216
  %vm2220 = vcmp.ge.s32.totalorder %v2215, %v2216
  %v2221 = vadd.s32 %v34, 1
  %v2222 = vmul.u32 %v2221, 4
  %vm2223 = vcmp.lt.s32.totalorder %v2212, %v2222
  %vm2224 = vcmp.lt.s32.totalorder %v2213, %v2222
  %vm2225 = vcmp.lt.s32.totalorder %v2214, %v2222
  %vm2226 = vcmp.lt.s32.totalorder %v2215, %v2222
  %vm2227 = vmand %vm2217, %vm2223
  %vm2228 = vmand %vm2218, %vm2224
  %vm2229 = vmand %vm2219, %vm2225
  %vm2230 = vmand %vm2220, %vm2226
  %2232 = vset.pattern.permute.xlu0 0
  %2233 = vperm.xlu0 %2232, %v2193
  %v2234 = vpop.permute.xlu0 %2233
  %2237 = vset.pattern.permute.xlu0 0
  %2238 = vperm.xlu0 %2237, %v2198
  %v2239 = vpop.permute.xlu0 %2238
  %2242 = vset.pattern.permute.xlu0 0
  %2243 = vperm.xlu0 %2242, %v2203
  %v2244 = vpop.permute.xlu0 %2243
  %2247 = vset.pattern.permute.xlu0 0
  %2248 = vperm.xlu0 %2247, %v2208
  %v2249 = vpop.permute.xlu0 %2248
  %v2251 = vsel %vm2227, %v2234, -inf
  %v2252 = vsel %vm2228, %v2239, -inf
  %v2253 = vsel %vm2229, %v2244, -inf
  %v2254 = vsel %vm2230, %v2249, -inf
  %vm2255 = vcmask 64512
  %v2256 = vsel %vm2255, %v2251, -inf
  %v2257 = vsel %vm2255, %v2252, -inf
  %v2258 = vsel %vm2255, %v2253, -inf
  %v2259 = vsel %vm2255, %v2254, -inf
  %v2260 = vmax.f32 %v2256, %v2257
  %v2261 = vmax.f32 %v2258, %v2259
  %v2262 = vmax.f32 %v2260, %v2261
  %v2263 = vrot.slane %v2262, 4
  %v2264 = vmax.f32 %v2262, %v2263
  %v2265 = vrot.slane %v2264, 2
  %v2266 = vmax.f32 %v2264, %v2265
  %v2267 = vrot.slane %v2266, 1
  %v2268 = vmax.f32 %v2266, %v2267
  %v2269 = vsel %vm2227, %v2268, 0.0
  %v2270 = vsel %vm2228, %v2268, 0.0
  %v2271 = vsel %vm2229, %v2268, 0.0
  %v2272 = vsel %vm2230, %v2268, 0.0
  %v2273 = vsel %vm2255, %v2269, 0.0
  %2274 = vadd.xlane.f32.xlu0 %v2273
  %v2275 = vpop.xlane.xlu0 %2274
  %v2276 = vsel %vm2255, %v2270, 0.0
  %2277 = vadd.xlane.f32.xlu0 %v2276
  %v2278 = vpop.xlane.xlu0 %2277
  %v2279 = vsel %vm2255, %v2271, 0.0
  %2280 = vadd.xlane.f32.xlu0 %v2279
  %v2281 = vpop.xlane.xlu0 %2280
  %v2282 = vsel %vm2255, %v2272, 0.0
  %2283 = vadd.xlane.f32.xlu0 %v2282
  %v2284 = vpop.xlane.xlu0 %2283
  %v2285 = vsub.f32 %v2193, %v2275
  %v2286 = vsub.f32 %v2198, %v2278
  %v2287 = vsub.f32 %v2203, %v2281
  %v2288 = vsub.f32 %v2208, %v2284
  %v2289 = vmul.f32 %v2285, 1.442695
  %v2290 = vpow.pop %v2289
  %v2291 = vmul.f32 %v2286, 1.442695
  %v2292 = vpow.pop %v2291
  %v2293 = vmul.f32 %v2287, 1.442695
  %v2294 = vpow.pop %v2293
  %v2295 = vmul.f32 %v2288, 1.442695
  %v2296 = vpow.pop %v2295
  %v2297 = vmul.u32 %v2212, 4
  %vm2298 = vcmp.ge.s32.totalorder %v34, %v2297
  %v2299 = vadd.s32 %v2212, 1
  %v2300 = vmul.u32 %v2299, 4
  %vm2301 = vcmp.lt.s32.totalorder %v34, %v2300
  %vm2302 = vmand %vm2298, %vm2301
  %v2303 = vsel %vm2302, 1, 0
  %v2304 = vcvt.s32.f32 %v2303
  %2306 = vset.pattern.permute.xlu0 0
  %2307 = vperm.xlu0 %2306, %v2290
  %v2308 = vpop.permute.xlu0 %2307
  %2311 = vset.pattern.permute.xlu0 0
  %2312 = vperm.xlu0 %2311, %v2292
  %v2313 = vpop.permute.xlu0 %2312
  %2316 = vset.pattern.permute.xlu0 0
  %2317 = vperm.xlu0 %2316, %v2294
  %v2318 = vpop.permute.xlu0 %2317
  %2321 = vset.pattern.permute.xlu0 0
  %2322 = vperm.xlu0 %2321, %v2296
  %v2323 = vpop.permute.xlu0 %2322
  %v2325 = vmul.f32 %v2308, %v1973
  %v2326 = vmul.f32 %v2308, %v1985
  %v2327 = vmul.f32 %v2313, %v1974
  %v2328 = vmul.f32 %v2313, %v1986
  %v2329 = vmul.f32 %v2318, %v1975
  %v2330 = vmul.f32 %v2318, %v1987
  %v2331 = vmul.f32 %v2323, %v1976
  %v2332 = vmul.f32 %v2323, %v1988
  %v2334 = vsel %vm1107, %v2304, 0
  %2336 = vmatprep.subr.mxu0 %v2326
  %2337 = vmatpush1.msra.mxu0 %v2325
  %2338 = vmatprep.subr.mxu0 %v2328
  %2339 = vmatpush1.msra.mxu0 %v2327
  %2340 = vmatprep.subr.mxu0 %v2330
  %2341 = vmatpush1.msra.mxu0 %v2329
  %2342 = vmatprep.subr.mxu0 %v2332
  %2343 = vmatpush1.msra.mxu0 %v2331
  %2344 = vmatprep.subr.mxu0 0.0
  %2345 = vmatpush1.msra.mxu0 0.0
  %2346 = vmatprep.subr.mxu0 0.0
  %2347 = vmatpush1.msra.mxu0 0.0
  %2348 = vmatprep.subr.mxu0 0.0
  %2349 = vmatpush1.msra.mxu0 0.0
  %2350 = vmatprep.subr.mxu0 0.0
  %2351 = vmatpush1.msra.mxu0 0.0
  %2352 = vmatprep.subr.mxu0 0.0
  %2353 = vmatpush1.msra.mxu0 0.0
  %2354 = vmatprep.subr.mxu0 0.0
  %2355 = vmatpush1.msra.mxu0 0.0
  %2356 = vmatprep.subr.mxu0 0.0
  %2357 = vmatpush1.msra.mxu0 0.0
  %2358 = vmatprep.subr.mxu0 0.0
  %2359 = vmatpush1.msra.mxu0 0.0
  %2360 = vmatprep.subr.mxu0 0.0
  %2361 = vmatpush1.msra.mxu0 0.0
  %2362 = vmatprep.subr.mxu0 0.0
  %2363 = vmatpush1.msra.mxu0 0.0
  %2364 = vmatprep.subr.mxu0 0.0
  %2365 = vmatpush1.msra.mxu0 0.0
  %2366 = vmatprep.subr.mxu0 0.0
  %2367 = vmatpush1.msra.mxu0 0.0
  %2368 = vmatprep.subr.mxu0 0.0
  %2369 = vmatpush1.msra.mxu0 0.0
  %2370 = vmatprep.subr.mxu0 0.0
  %2371 = vmatpush1.msra.mxu0 0.0
  %2372 = vmatprep.subr.mxu0 0.0
  %2373 = vmatpush1.msra.mxu0 0.0
  %2374 = vmatprep.subr.mxu0 0.0
  %2375 = vmatpush1.msra.mxu0 0.0
  %2376 = vmatprep.subr.mxu0 0.0
  %2377 = vmatpush1.msra.mxu0 0.0
  %2378 = vmatprep.subr.mxu0 0.0
  %2379 = vmatpush1.msra.mxu0 0.0
  %2380 = vmatprep.subr.mxu0 0.0
  %2381 = vmatpush1.msra.mxu0 0.0
  %2382 = vmatprep.subr.mxu0 0.0
  %2383 = vmatpush1.msra.mxu0 0.0
  %2384 = vmatprep.subr.mxu0 0.0
  %2385 = vmatpush1.msra.mxu0 0.0
  %2386 = vmatprep.subr.mxu0 0.0
  %2387 = vmatpush1.msra.mxu0 0.0
  %2388 = vmatprep.subr.mxu0 0.0
  %2389 = vmatpush1.msra.mxu0 0.0
  %2390 = vmatprep.subr.mxu0 0.0
  %2391 = vmatpush1.msra.mxu0 0.0
  %2392 = vmatprep.subr.mxu0 0.0
  %2393 = vmatpush1.msra.mxu0 0.0
  %2394 = vmatprep.subr.mxu0 0.0
  %2395 = vmatpush1.msra.mxu0 0.0
  %2396 = vmatprep.subr.mxu0 0.0
  %2397 = vmatpush1.msra.mxu0 0.0
  %2398 = vmatprep.subr.mxu0 0.0
  %2399 = vmatpush1.msra.mxu0 0.0
  %2400 = vmatprep.mubr.f32.mxu0 0.0
  %2401 = vmatmul.mubr.f32.gmra.mrb[0].mxu0 %v2334
  %v2402 = vpop.f32.mrb[0].mxu0
  %v2403 = vadd.f32 0.0, %v2402
  %v2404 = vpop.f32.mrb[0].mxu0
  %v2405 = vadd.f32 0.0, %v2404
  %2406 = vdwg.mxu0
  %2407 = vmatprep.subr.mxu0 0.0
  %2408 = vmatpush1.msra.mxu0 %v2290
  %2409 = vmatprep.subr.mxu0 0.0
  %2410 = vmatpush1.msra.mxu0 %v2292
  %2411 = vmatprep.subr.mxu0 0.0
  %2412 = vmatpush1.msra.mxu0 %v2294
  %2413 = vmatprep.subr.mxu0 0.0
  %2414 = vmatpush1.msra.mxu0 %v2296
  %2415 = vmatprep.subr.mxu0 0.0
  %2416 = vmatpush1.msra.mxu0 0.0
  %2417 = vmatprep.subr.mxu0 0.0
  %2418 = vmatpush1.msra.mxu0 0.0
  %2419 = vmatprep.subr.mxu0 0.0
  %2420 = vmatpush1.msra.mxu0 0.0
  %2421 = vmatprep.subr.mxu0 0.0
  %2422 = vmatpush1.msra.mxu0 0.0
  %2423 = vmatprep.subr.mxu0 0.0
  %2424 = vmatpush1.msra.mxu0 0.0
  %2425 = vmatprep.subr.mxu0 0.0
  %2426 = vmatpush1.msra.mxu0 0.0
  %2427 = vmatprep.subr.mxu0 0.0
  %2428 = vmatpush1.msra.mxu0 0.0
  %2429 = vmatprep.subr.mxu0 0.0
  %2430 = vmatpush1.msra.mxu0 0.0
  %2431 = vmatprep.subr.mxu0 0.0
  %2432 = vmatpush1.msra.mxu0 0.0
  %2433 = vmatprep.subr.mxu0 0.0
  %2434 = vmatpush1.msra.mxu0 0.0
  %2435 = vmatprep.subr.mxu0 0.0
  %2436 = vmatpush1.msra.mxu0 0.0
  %2437 = vmatprep.subr.mxu0 0.0
  %2438 = vmatpush1.msra.mxu0 0.0
  %2439 = vmatprep.subr.mxu0 0.0
  %2440 = vmatpush1.msra.mxu0 0.0
  %2441 = vmatprep.subr.mxu0 0.0
  %2442 = vmatpush1.msra.mxu0 0.0
  %2443 = vmatprep.subr.mxu0 0.0
  %2444 = vmatpush1.msra.mxu0 0.0
  %2445 = vmatprep.subr.mxu0 0.0
  %2446 = vmatpush1.msra.mxu0 0.0
  %2447 = vmatprep.subr.mxu0 0.0
  %2448 = vmatpush1.msra.mxu0 0.0
  %2449 = vmatprep.subr.mxu0 0.0
  %2450 = vmatpush1.msra.mxu0 0.0
  %2451 = vmatprep.subr.mxu0 0.0
  %2452 = vmatpush1.msra.mxu0 0.0
  %2453 = vmatprep.subr.mxu0 0.0
  %2454 = vmatpush1.msra.mxu0 0.0
  %2455 = vmatprep.subr.mxu0 0.0
  %2456 = vmatpush1.msra.mxu0 0.0
  %2457 = vmatprep.subr.mxu0 0.0
  %2458 = vmatpush1.msra.mxu0 0.0
  %2459 = vmatprep.subr.mxu0 0.0
  %2460 = vmatpush1.msra.mxu0 0.0
  %2461 = vmatprep.subr.mxu0 0.0
  %2462 = vmatpush1.msra.mxu0 0.0
  %2463 = vmatprep.subr.mxu0 0.0
  %2464 = vmatpush1.msra.mxu0 0.0
  %2465 = vmatprep.subr.mxu0 0.0
  %2466 = vmatpush1.msra.mxu0 0.0
  %2467 = vmatprep.subr.mxu0 0.0
  %2468 = vmatpush1.msra.mxu0 0.0
  %2469 = vmatprep.subr.mxu0 0.0
  %2470 = vmatpush1.msra.mxu0 0.0
  %2471 = vmatprep.mubr.f32.mxu0 0.0
  %2472 = vmatmul.mubr.f32.gmra.mrb[0].mxu0 %v2334
  %v2473 = vpop.f32.mrb[0].mxu0
  %v2474 = vadd.f32 0.0, %v2473
  %v2475 = vpop.f32.mrb[0].mxu0
  %2476 = vdwg.mxu0
  %v2477 = vrcp.pop %v2474
  %v2478 = vmul.f32 1.0, %v2477
  %2480 = vset.pattern.permute.xlu0 0
  %2481 = vperm.xlu0 %2480, %v2478
  %v2482 = vpop.permute.xlu0 %2481
  %v2484 = vmul.f32 %v2403, %v2482
  %v2485 = vmul.f32 %v2405, %v2482
  %2486 = vst [vmem:[%s9] sm:$0xff] %v2484
  %2487 = vst [vmem:[%s9 + $0x8] sm:$0xff] %v2485
  // Predicated region
  $region38: #{mie_forward.1} parent=0 // pred_check
    _
  $region39: #{mie_forward.1} parent=0 // pred_check_branch
    %2489 = sbr.rel (0) target = $region41
  $region40: #{mie_forward.1} parent=0 // pred_region
    _
  $region41: #{mie_forward.1} parent=0 // pred_fallthru
    _
  // Predicated region
  $region42: #{mie_forward.1} parent=0 // pred_check
    _
  $region43: #{mie_forward.1} parent=0 // pred_check_branch
    %2491 = sbr.rel (0) target = $region45
  $region44: #{mie_forward.1} parent=0 // pred_region
    _
  $region45: #{mie_forward.1} parent=0 // pred_fallthru
    _

</llo_original>
